<compile_context>
chip_gen: v7x
topology: tpu7x:2x2x1
jax: 0.10.0
libtpu: 0.0.40
codegen_flags: <defaults>
</compile_context>

<pallas_src>
import jax
import jax.numpy as jnp
from jax.experimental import pallas as pl
from jax.experimental.pallas import tpu as pltpu

BERT_OUTPUT_DIM = 1024
HIDDEN_LAYER_1 = BERT_OUTPUT_DIM // 2          # 512
GROUP_THEME_NUM_CLASSES = 26
THEME_HEAD_OUT = 256                           # nn.Linear(512, 256) in the module
FUSED_HEAD_OUT = 384                           # 26 + 256 = 282, padded lane-dense to 384


def _round_up(x, m):
    return (x + m - 1) // m * m


def _classifier_kernel(emb_ref, mask_ref,
                       w1_ref, b1_ref,
                       w23_ref, b23_ref,
                       out_ref,
                       acc_ref, msum_ref):
    s = pl.program_id(1)

    @pl.when(s == 0)
    def _init():
        acc_ref[...] = jnp.zeros_like(acc_ref)
        msum_ref[...] = jnp.zeros_like(msum_ref)

    emb = emb_ref[...]                          # [TB, TS, D] f32
    m3 = mask_ref[...]                          # [TB, TS, 1] f32

    # accumulate masked sums for this sequence tile
    acc_ref[...] += jnp.sum(emb * m3, axis=1)   # [TB, D]
    msum_ref[...] += jnp.sum(m3, axis=1)        # [TB, 1]

    @pl.when(s == pl.num_programs(1) - 1)
    def _finalize():
        # masked mean: sum_embeddings / clamp(sum_mask, 1e-9)
        inv = pl.reciprocal(jnp.maximum(msum_ref[...], 1e-9), approx=True)
        pooled = acc_ref[...] * inv             # [TB, D]
        # hidden = ReLU(pooled @ W1 + b1); Dropout == identity (eval)
        h = jnp.dot(pooled, w1_ref[...],
                    preferred_element_type=jnp.float32) + b1_ref[...]
        h = jnp.maximum(h, 0.0)                 # [TB, 512]
        # fused heads: [group_theme (26) | theme (256) | zero-pad] = 384 lanes
        out_ref[...] = (jnp.dot(h, w23_ref[...],
                                preferred_element_type=jnp.float32)
                        + b23_ref[...]).astype(out_ref.dtype)


def theme_classifier_forward(token_embeddings, attention_mask, params,
                             *, tb=None, ts=None):
    """token_embeddings: [B, S, D] f32, attention_mask: [B, S] f32.

    Returns (group_theme_logits [B, 26], theme_logits [B, 256]).
    """
    B, S, D = token_embeddings.shape
    assert D == BERT_OUTPUT_DIM
    w1, b1, w2, b2, w3, b3 = params

    # --- tile sizes: MXU-friendly batch tile, VMEM-friendly sequence tile ---
    if tb is None:
        tb = min(128, _round_up(B, 8))          # up to 128 M-rows for the MXU
    if ts is None:
        ts = min(16, _round_up(S, 8))           # 2 x (TB,TS,1024) f32 <= 16 MiB
    Bp = _round_up(B, tb)
    Sp = _round_up(S, ts)

    # --- pad batch/sequence; padded rows carry zero mask -> pooled == 0 ---
    emb = token_embeddings
    mask = attention_mask.astype(jnp.float32)
    if (Bp, Sp) != (B, S):
        emb = jnp.pad(emb, ((0, Bp - B), (0, Sp - S), (0, 0)))
        mask = jnp.pad(mask, ((0, Bp - B), (0, Sp - S)))
    mask3 = mask[..., None]                     # [Bp, Sp, 1]

    # --- fuse the two heads into one lane-dense [512, 384] weight/bias ---
    w23 = jnp.zeros((HIDDEN_LAYER_1, FUSED_HEAD_OUT), jnp.float32)
    w23 = w23.at[:, :GROUP_THEME_NUM_CLASSES].set(w2)
    w23 = w23.at[:, GROUP_THEME_NUM_CLASSES:
                 GROUP_THEME_NUM_CLASSES + THEME_HEAD_OUT].set(w3)
    b23 = jnp.zeros((1, FUSED_HEAD_OUT), jnp.float32)
    b23 = b23.at[:, :GROUP_THEME_NUM_CLASSES].set(b2)
    b23 = b23.at[:, GROUP_THEME_NUM_CLASSES:
                 GROUP_THEME_NUM_CLASSES + THEME_HEAD_OUT].set(b3)

    grid = (Bp // tb, Sp // ts)

    # --- explicit VMEM budget (double-buffered tiles + resident weights) ---
    weight_bytes = (D * HIDDEN_LAYER_1 + HIDDEN_LAYER_1
                    + HIDDEN_LAYER_1 * FUSED_HEAD_OUT + FUSED_HEAD_OUT) * 4
    emb_buf = 2 * tb * ts * D * 4
    mask_buf = 2 * tb * ts * 128 * 4            # mask tile lane-padded to 128
    out_buf = 2 * tb * FUSED_HEAD_OUT * 4
    scratch_buf = tb * (D + 128) * 4
    vmem_limit = min(48 * 1024 * 1024,
                     max(16 * 1024 * 1024,
                         int(1.5 * (emb_buf + mask_buf + 2 * weight_bytes
                                    + out_buf + scratch_buf))))

    cost = pl.CostEstimate(
        flops=(2 * Bp * Sp * D                                   # pooling
               + 2 * Bp * (D * HIDDEN_LAYER_1
                           + HIDDEN_LAYER_1 * FUSED_HEAD_OUT)),  # matmuls
        transcendentals=Bp,                                      # reciprocal
        bytes_accessed=((Bp * Sp * D + Bp * Sp) * 4
                        + weight_bytes + Bp * FUSED_HEAD_OUT * 4),
    )

    fused = pl.pallas_call(
        _classifier_kernel,
        out_shape=jax.ShapeDtypeStruct((Bp, FUSED_HEAD_OUT), jnp.float32),
        grid_spec=pltpu.PrefetchScalarGridSpec(
            num_scalar_prefetch=0,
            grid=grid,
            in_specs=[
                pl.BlockSpec((tb, ts, D), lambda b, s: (b, s, 0)),
                pl.BlockSpec((tb, ts, 1), lambda b, s: (b, s, 0)),
                pl.BlockSpec((D, HIDDEN_LAYER_1), lambda b, s: (0, 0)),
                pl.BlockSpec((1, HIDDEN_LAYER_1), lambda b, s: (0, 0)),
                pl.BlockSpec((HIDDEN_LAYER_1, FUSED_HEAD_OUT), lambda b, s: (0, 0)),
                pl.BlockSpec((1, FUSED_HEAD_OUT), lambda b, s: (0, 0)),
            ],
            out_specs=pl.BlockSpec((tb, FUSED_HEAD_OUT), lambda b, s: (b, 0)),
            scratch_shapes=[
                pltpu.VMEM((tb, D), jnp.float32),    # masked-sum accumulator
                pltpu.VMEM((tb, 1), jnp.float32),    # mask-count accumulator
            ],
        ),
        compiler_params=pltpu.CompilerParams(
            dimension_semantics=("parallel", "arbitrary"),
            vmem_limit_bytes=vmem_limit,
        ),
        cost_estimate=cost,
    )(emb, mask3, w1, b1, w23, b23)

    group_theme_logits = fused[:B, :GROUP_THEME_NUM_CLASSES]
    theme_logits = fused[:B, GROUP_THEME_NUM_CLASSES:
                         GROUP_THEME_NUM_CLASSES + THEME_HEAD_OUT]
    return group_theme_logits, theme_logits


def init_params(key):
    """Deterministic synthetic parameters, shapes per the module's __init__.

    Weights are kept as [in, out] (transpose of PyTorch's [out, in]) so the
    kernel computes y = x @ W + b directly.
    """
    k1, k2, k3, k4, k5, k6 = jax.random.split(key, 6)
    scale = 0.02
    w1 = scale * jax.random.normal(k1, (BERT_OUTPUT_DIM, HIDDEN_LAYER_1), jnp.float32)
    b1 = scale * jax.random.normal(k2, (1, HIDDEN_LAYER_1), jnp.float32)
    w2 = scale * jax.random.normal(k3, (HIDDEN_LAYER_1, GROUP_THEME_NUM_CLASSES), jnp.float32)
    b2 = scale * jax.random.normal(k4, (1, GROUP_THEME_NUM_CLASSES), jnp.float32)
    w3 = scale * jax.random.normal(k5, (HIDDEN_LAYER_1, THEME_HEAD_OUT), jnp.float32)
    b3 = scale * jax.random.normal(k6, (1, THEME_HEAD_OUT), jnp.float32)
    return (w1, b1, w2, b2, w3, b3)


def reference_forward(token_embeddings, attention_mask, params):
    """Pure-JAX reference mirroring the PyTorch forward (eval mode)."""
    w1, b1, w2, b2, w3, b3 = params
    m3 = attention_mask[:, :, None]
    sum_emb = jnp.sum(token_embeddings * m3, axis=1)
    sum_mask = jnp.clip(jnp.sum(m3, axis=1), 1e-9, None)
    pooled = sum_emb / sum_mask
    h = jnp.maximum(pooled @ w1 + b1, 0.0)
    return h @ w2 + b2, h @ w3 + b3


if __name__ == "__main__":
    key = jax.random.PRNGKey(0)
    k_emb, k_emb2, k_par = jax.random.split(key, 3)

    params = init_params(k_par)

    # ---- case 1: small shapes consistent with the module ----
    B, S = 2, 8
    token_embeddings = jax.random.normal(k_emb, (B, S, BERT_OUTPUT_DIM), jnp.float32)
    lengths = jnp.array([6, 4], dtype=jnp.int32)
    attention_mask = (jnp.arange(S)[None, :] < lengths[:, None]).astype(jnp.float32)

    gt_logits, th_logits = theme_classifier_forward(token_embeddings, attention_mask, params)
    jax.block_until_ready((gt_logits, th_logits))

    gt_ref, th_ref = reference_forward(token_embeddings, attention_mask, params)
    assert gt_logits.shape == (B, GROUP_THEME_NUM_CLASSES)
    assert th_logits.shape == (B, THEME_HEAD_OUT)
    assert jnp.allclose(gt_logits, gt_ref, atol=2e-3, rtol=2e-3)
    assert jnp.allclose(th_logits, th_ref, atol=2e-3, rtol=2e-3)

    # ---- case 2: exercises batch/seq padding + multi-step S accumulation ----
    B2, S2 = 5, 20                               # pads to (8, 24); grid = (1, 3)
    emb2 = jax.random.normal(k_emb2, (B2, S2, BERT_OUTPUT_DIM), jnp.float32)
    lengths2 = jnp.array([20, 13, 7, 1, 0], dtype=jnp.int32)
    mask2 = (jnp.arange(S2)[None, :] < lengths2[:, None]).astype(jnp.float32)

    gt2, th2 = theme_classifier_forward(emb2, mask2, params, tb=8, ts=8)
    jax.block_until_ready((gt2, th2))
    gt2_ref, th2_ref = reference_forward(emb2, mask2, params)
    assert jnp.allclose(gt2, gt2_ref, atol=2e-3, rtol=2e-3)
    assert jnp.allclose(th2, th2_ref, atol=2e-3, rtol=2e-3)

    print("KERNEL_OK")
</pallas_src>

<mosaic_0001>
module attributes {stable_mosaic.version = 11 : i64} {
  func.func @_classifier_kernel(%arg0: i32, %arg1: i32, %arg2: memref<8x8x1024xf32, #tpu.memory_space<vmem>>, %arg3: memref<8x8x1xf32, #tpu.memory_space<vmem>>, %arg4: memref<1024x512xf32, #tpu.memory_space<vmem>>, %arg5: memref<1x512xf32, #tpu.memory_space<vmem>>, %arg6: memref<512x384xf32, #tpu.memory_space<vmem>>, %arg7: memref<1x384xf32, #tpu.memory_space<vmem>>, %arg8: memref<8x384xf32, #tpu.memory_space<vmem>>, %arg9: memref<8x1024xf32, #tpu.memory_space<vmem>>, %arg10: memref<8x1xf32, #tpu.memory_space<vmem>>) attributes {dimension_semantics = [#tpu.dimension_semantics<parallel>, #tpu.dimension_semantics<arbitrary>], iteration_bounds = array<i64: 1, 1>, scalar_prefetch = 0 : i64, scratch_operands = 2 : i64, tpu.core_type = #tpu.core_type<tc>, window_params = [{transform_indices = @transform_0, window_bounds = array<i64: 8, 8, 1024>}, {transform_indices = @transform_1, window_bounds = array<i64: 8, 8, 1>}, {pipeline_mode = #tpu.pipeline_mode<synchronous>, transform_indices = @transform_2, window_bounds = array<i64: 1024, 512>}, {pipeline_mode = #tpu.pipeline_mode<synchronous>, transform_indices = @transform_3, window_bounds = array<i64: 1, 512>}, {pipeline_mode = #tpu.pipeline_mode<synchronous>, transform_indices = @transform_4, window_bounds = array<i64: 512, 384>}, {pipeline_mode = #tpu.pipeline_mode<synchronous>, transform_indices = @transform_5, window_bounds = array<i64: 1, 384>}, {transform_indices = @transform_6, window_bounds = array<i64: 8, 384>}]} {
    %c0_i32 = arith.constant 0 : i32
    %0 = arith.cmpi eq, %arg1, %c0_i32 : i32
    %1 = arith.extui %0 : i1 to i32
    %c0_i32_0 = arith.constant 0 : i32
    %2 = arith.cmpi ne, %1, %c0_i32_0 : i32
    scf.if %2 {
      %cst_17 = arith.constant 0.000000e+00 : f32
      %18 = vector.broadcast %cst_17 : f32 to vector<8x1024xf32>
      %c0_18 = arith.constant 0 : index
      %c0_19 = arith.constant 0 : index
      %19 = vector.load %arg9[%c0_18, %c0_19] : memref<8x1024xf32, #tpu.memory_space<vmem>>, vector<8x1024xf32>
      tpu.vector_store %arg9[%c0_18, %c0_19], %18 {strides = array<i32>} : memref<8x1024xf32, #tpu.memory_space<vmem>>, vector<8x1024xf32>,
      %cst_20 = arith.constant 0.000000e+00 : f32
      %20 = vector.broadcast %cst_20 : f32 to vector<8x1xf32>
      %c0_21 = arith.constant 0 : index
      %c0_22 = arith.constant 0 : index
      %21 = vector.load %arg10[%c0_21, %c0_22] : memref<8x1xf32, #tpu.memory_space<vmem>>, vector<8x1xf32>
      tpu.vector_store %arg10[%c0_21, %c0_22], %20 {strides = array<i32>} : memref<8x1xf32, #tpu.memory_space<vmem>>, vector<8x1xf32>,
    } else {
    }
    %c0 = arith.constant 0 : index
    %c0_1 = arith.constant 0 : index
    %c0_2 = arith.constant 0 : index
    %3 = vector.load %arg2[%c0, %c0_1, %c0_2] : memref<8x8x1024xf32, #tpu.memory_space<vmem>>, vector<8x8x1024xf32>
    %c0_3 = arith.constant 0 : index
    %c0_4 = arith.constant 0 : index
    %c0_5 = arith.constant 0 : index
    %4 = vector.load %arg3[%c0_3, %c0_4, %c0_5] : memref<8x8x1xf32, #tpu.memory_space<vmem>>, vector<8x8x1xf32>
    %c0_6 = arith.constant 0 : index
    %c0_7 = arith.constant 0 : index
    %5 = vector.load %arg9[%c0_6, %c0_7] : memref<8x1024xf32, #tpu.memory_space<vmem>>, vector<8x1024xf32>
    %6 = vector.broadcast %4 : vector<8x8x1xf32> to vector<8x8x1024xf32>
    %7 = arith.mulf %3, %6 : vector<8x8x1024xf32>
    %cst = arith.constant dense<0.000000e+00> : vector<8x1024xf32>
    %8 = vector.multi_reduction <add>, %7, %cst [1] : vector<8x8x1024xf32> to vector<8x1024xf32>
    %9 = arith.addf %5, %8 : vector<8x1024xf32>
    %c0_8 = arith.constant 0 : index
    %c0_9 = arith.constant 0 : index
    %10 = vector.load %arg9[%c0_8, %c0_9] : memref<8x1024xf32, #tpu.memory_space<vmem>>, vector<8x1024xf32>
    tpu.vector_store %arg9[%c0_8, %c0_9], %9 {strides = array<i32>} : memref<8x1024xf32, #tpu.memory_space<vmem>>, vector<8x1024xf32>,
    %c0_10 = arith.constant 0 : index
    %c0_11 = arith.constant 0 : index
    %11 = vector.load %arg10[%c0_10, %c0_11] : memref<8x1xf32, #tpu.memory_space<vmem>>, vector<8x1xf32>
    %cst_12 = arith.constant dense<0.000000e+00> : vector<8x1xf32>
    %12 = vector.multi_reduction <add>, %4, %cst_12 [1] : vector<8x8x1xf32> to vector<8x1xf32>
    %13 = arith.addf %11, %12 : vector<8x1xf32>
    %c0_13 = arith.constant 0 : index
    %c0_14 = arith.constant 0 : index
    %14 = vector.load %arg10[%c0_13, %c0_14] : memref<8x1xf32, #tpu.memory_space<vmem>>, vector<8x1xf32>
    tpu.vector_store %arg10[%c0_13, %c0_14], %13 {strides = array<i32>} : memref<8x1xf32, #tpu.memory_space<vmem>>, vector<8x1xf32>,
    %c0_i32_15 = arith.constant 0 : i32
    %15 = arith.cmpi eq, %arg1, %c0_i32_15 : i32
    %16 = arith.extui %15 : i1 to i32
    %c0_i32_16 = arith.constant 0 : i32
    %17 = arith.cmpi ne, %16, %c0_i32_16 : i32
    scf.if %17 {
      %c0_17 = arith.constant 0 : index
      %c0_18 = arith.constant 0 : index
      %18 = vector.load %arg10[%c0_17, %c0_18] : memref<8x1xf32, #tpu.memory_space<vmem>>, vector<8x1xf32>
      %cst_19 = arith.constant 9.99999971E-10 : f32
      %19 = vector.broadcast %cst_19 : f32 to vector<8x1xf32>
      %20 = arith.maximumf %18, %19 : vector<8x1xf32>
      %21 = tpu.reciprocal %20 {approx = true} : vector<8x1xf32> -> vector<8x1xf32>
      %c0_20 = arith.constant 0 : index
      %c0_21 = arith.constant 0 : index
      %22 = vector.load %arg9[%c0_20, %c0_21] : memref<8x1024xf32, #tpu.memory_space<vmem>>, vector<8x1024xf32>
      %23 = vector.broadcast %21 : vector<8x1xf32> to vector<8x1024xf32>
      %24 = arith.mulf %22, %23 : vector<8x1024xf32>
      %c0_22 = arith.constant 0 : index
      %c0_23 = arith.constant 0 : index
      %25 = vector.load %arg4[%c0_22, %c0_23] : memref<1024x512xf32, #tpu.memory_space<vmem>>, vector<1024x512xf32>
      %cst_24 = arith.constant dense<0.000000e+00> : vector<8x512xf32>
      %26 = tpu.matmul %24, %25, %cst_24 {dimension_numbers = #tpu.dot_dimension_numbers<[1], [0], [0], [1], [0, 0, 1, 1], [], []>} : vector<8x1024xf32>, vector<1024x512xf32>, vector<8x512xf32> -> vector<8x512xf32>
      %c0_25 = arith.constant 0 : index
      %c0_26 = arith.constant 0 : index
      %27 = vector.load %arg5[%c0_25, %c0_26] : memref<1x512xf32, #tpu.memory_space<vmem>>, vector<1x512xf32>
      %28 = vector.broadcast %27 : vector<1x512xf32> to vector<8x512xf32>
      %29 = arith.addf %26, %28 : vector<8x512xf32>
      %cst_27 = arith.constant 0.000000e+00 : f32
      %30 = vector.broadcast %cst_27 : f32 to vector<8x512xf32>
      %31 = arith.maximumf %29, %30 : vector<8x512xf32>
      %c0_28 = arith.constant 0 : index
      %c0_29 = arith.constant 0 : index
      %32 = vector.load %arg6[%c0_28, %c0_29] : memref<512x384xf32, #tpu.memory_space<vmem>>, vector<512x384xf32>
      %cst_30 = arith.constant dense<0.000000e+00> : vector<8x384xf32>
      %33 = tpu.matmul %31, %32, %cst_30 {dimension_numbers = #tpu.dot_dimension_numbers<[1], [0], [0], [1], [0, 0, 1, 1], [], []>} : vector<8x512xf32>, vector<512x384xf32>, vector<8x384xf32> -> vector<8x384xf32>
      %c0_31 = arith.constant 0 : index
      %c0_32 = arith.constant 0 : index
      %34 = vector.load %arg7[%c0_31, %c0_32] : memref<1x384xf32, #tpu.memory_space<vmem>>, vector<1x384xf32>
      %35 = vector.broadcast %34 : vector<1x384xf32> to vector<8x384xf32>
      %36 = arith.addf %33, %35 : vector<8x384xf32>
      %c0_33 = arith.constant 0 : index
      %c0_34 = arith.constant 0 : index
      %37 = vector.load %arg8[%c0_33, %c0_34] : memref<8x384xf32, #tpu.memory_space<vmem>>, vector<8x384xf32>
      tpu.vector_store %arg8[%c0_33, %c0_34], %36 {strides = array<i32>} : memref<8x384xf32, #tpu.memory_space<vmem>>, vector<8x384xf32>,
    } else {
    }
    return
  }
  func.func @transform_0(%arg0: i32, %arg1: i32) -> (i32, i32, i32) {
    %c0_i32 = arith.constant 0 : i32
    %c0_i32_0 = arith.constant 0 : i32
    return %arg0, %arg1, %c0_i32 : i32, i32, i32
  }
  func.func @transform_1(%arg0: i32, %arg1: i32) -> (i32, i32, i32) {
    %c0_i32 = arith.constant 0 : i32
    %c0_i32_0 = arith.constant 0 : i32
    return %arg0, %arg1, %c0_i32 : i32, i32, i32
  }
  func.func @transform_2(%arg0: i32, %arg1: i32) -> (i32, i32) {
    %c0_i32 = arith.constant 0 : i32
    %c0_i32_0 = arith.constant 0 : i32
    %c0_i32_1 = arith.constant 0 : i32
    return %c0_i32, %c0_i32_0 : i32, i32
  }
  func.func @transform_3(%arg0: i32, %arg1: i32) -> (i32, i32) {
    %c0_i32 = arith.constant 0 : i32
    %c0_i32_0 = arith.constant 0 : i32
    %c0_i32_1 = arith.constant 0 : i32
    return %c0_i32, %c0_i32_0 : i32, i32
  }
  func.func @transform_4(%arg0: i32, %arg1: i32) -> (i32, i32) {
    %c0_i32 = arith.constant 0 : i32
    %c0_i32_0 = arith.constant 0 : i32
    %c0_i32_1 = arith.constant 0 : i32
    return %c0_i32, %c0_i32_0 : i32, i32
  }
  func.func @transform_5(%arg0: i32, %arg1: i32) -> (i32, i32) {
    %c0_i32 = arith.constant 0 : i32
    %c0_i32_0 = arith.constant 0 : i32
    %c0_i32_1 = arith.constant 0 : i32
    return %c0_i32, %c0_i32_0 : i32, i32
  }
  func.func @transform_6(%arg0: i32, %arg1: i32) -> (i32, i32) {
    %c0_i32 = arith.constant 0 : i32
    %c0_i32_0 = arith.constant 0 : i32
    return %arg0, %c0_i32 : i32, i32
  }
}

</mosaic_0001>

<llo_original>
// kernel: tpu_custom_call.1
$region0: #{tpu_custom_call.1}
  #allocation0 [shape = 'u32[]', space=smem, size = 0x4, offset = 0x4, fixed_abs, tag = 'smem constant byte address 0x4 - core index']
  #allocation1 [shape = 'u32[144,128]{1,0:T(1,128)}', space=vmem, size = 0x12000, scoped, tag = 'internal scratch']
  #allocation2 [shape = 'f32[8,1024]{1,0:T(8,128)}', space=vmem, size = 0x8000, scoped, tag = 'scratch operand']
  #allocation3 [shape = 'f32[8,1]{1,0:T(8,128)}', space=vmem, size = 0x1000, scoped, tag = 'scratch operand']
  %s0 = inlined_call_operand.hbm [shape: f32[8,8,1024], index: 0, kind: input, shape index: {}]
  %s1 = inlined_call_operand.vmem [shape: f32[8,8,1], index: 1, kind: input, shape index: {}]
  %s2 = inlined_call_operand.hbm [shape: f32[1024,512], index: 2, kind: input, shape index: {}]
  %s3 = inlined_call_operand.hbm [shape: f32[1,512], index: 3, kind: input, shape index: {}]
  %s4 = inlined_call_operand.hbm [shape: f32[512,384], index: 4, kind: input, shape index: {}]
  %s5 = inlined_call_operand.hbm [shape: f32[1,384], index: 5, kind: input, shape index: {}]
  %s6 = inlined_call_operand.hbm [shape: f32[8,384], index: 6, kind: output, shape index: {}]
  %s7 = sld [smem:[#allocation0]]
  $region62: #{tpu_custom_call.1} parent=0
    _
  %s9 = ssub.s32 1, %s7
  %s10 = scalar_select 0, %s9, %s7
  $region1: #{tpu_custom_call.1} parent=0
    #allocation4 [shape = 'u8[262144]{0}', space=vmem, size = 0x40000, scoped, tag = 'input window, operand 0, single buffered']
    #allocation5 [shape = 's32[1]{0}', space=sflag, size = 0x4, scoped, tag = 'scoped memory for tpu_custom_call.1']
    #allocation6 [shape = 's32[1]{0}', space=sflag, size = 0x4, scoped, tag = 'scoped memory for tpu_custom_call.1']
    #allocation7 [shape = 'u8[2097152]{0}', space=vmem, size = 0x200000, scoped, tag = 'input window, operand 2, single buffered']
    #allocation8 [shape = 's32[1]{0}', space=sflag, size = 0x4, scoped, tag = 'scoped memory for tpu_custom_call.1']
    #allocation9 [shape = 'u8[2048]{0}', space=vmem, size = 0x800, scoped, tag = 'input window, operand 3, single buffered']
    #allocation10 [shape = 'u8[786432]{0}', space=vmem, size = 0xc0000, scoped, tag = 'input window, operand 4, single buffered']
    #allocation11 [shape = 's32[1]{0}', space=sflag, size = 0x4, scoped, tag = 'scoped memory for tpu_custom_call.1']
    #allocation12 [shape = 'u8[1536]{0}', space=vmem, size = 0x800, scoped, tag = 'input window, operand 5, single buffered']
    #allocation13 [shape = 'u8[12288]{0}', space=vmem, size = 0x3000, scoped, tag = 'output window, operand 0, single buffered']
    %11 = vsyncpa [#allocation5], 0
    %12 = vsyncpa [#allocation8], 0
    %13 = vsyncpa [#allocation11], 0
    %14 = vsyncpa [#allocation6], 0
    // Predicated region
    $region2: #{tpu_custom_call.1} parent=1 // pred_check
      _
    $region3: #{tpu_custom_call.1} parent=1 // pred_check_branch
      %16 = sbr.rel (0) target = $region5
    $region4: #{tpu_custom_call.1} parent=1 // pred_region
      %s18 = ssub.s32 8192, 8192
      %19 = vsyncadd [#allocation5], %s18
      %s20 = sshll.u32 [#allocation4], 4
      %s21 = int_to_ptr.vmem [resolvable:$true] %s20
      %26 = dma.hbm_to_vmem [thread:$0]  %s0, 8192, %s21, [#allocation5], 1024, 1024, 64
    $region5: #{tpu_custom_call.1} parent=1 // pred_fallthru
      _
    // Predicated region
    $region6: #{tpu_custom_call.1} parent=1 // pred_check
      _
    $region7: #{tpu_custom_call.1} parent=1 // pred_check_branch
      %28 = sbr.rel (0) target = $region9
    $region8: #{tpu_custom_call.1} parent=1 // pred_region
      _
    $region9: #{tpu_custom_call.1} parent=1 // pred_fallthru
      _
    // Predicated region
    $region10: #{tpu_custom_call.1} parent=1 // pred_check
      _
    $region11: #{tpu_custom_call.1} parent=1 // pred_check_branch
      %30 = sbr.rel (0) target = $region13
    $region12: #{tpu_custom_call.1} parent=1 // pred_region
      %s32 = ssub.s32 65536, 65536
      %33 = vsyncadd [#allocation8], %s32
      %s34 = sshll.u32 [#allocation7], 4
      %s35 = int_to_ptr.vmem [resolvable:$true] %s34
      %40 = dma.hbm_to_vmem [thread:$0]  %s2, 65536, %s35, [#allocation8], 512, 512, 32
    $region13: #{tpu_custom_call.1} parent=1 // pred_fallthru
      _
    // Predicated region
    $region14: #{tpu_custom_call.1} parent=1 // pred_check
      _
    $region15: #{tpu_custom_call.1} parent=1 // pred_check_branch
      %42 = sbr.rel (0) target = $region17
    $region16: #{tpu_custom_call.1} parent=1 // pred_region
      %s44 = ssub.s32 64, 64
      %45 = vsyncadd [#allocation8], %s44
      %s47 = sshll.u32 [#allocation9], 4
      %s48 = int_to_ptr.vmem [resolvable:$true] %s47
      %50 = dma.hbm_to_vmem [thread:$0]  %s3, 64, %s48, [#allocation8]
    $region17: #{tpu_custom_call.1} parent=1 // pred_fallthru
      _
    // Predicated region
    $region18: #{tpu_custom_call.1} parent=1 // pred_check
      _
    $region19: #{tpu_custom_call.1} parent=1 // pred_check_branch
      %52 = sbr.rel (0) target = $region21
    $region20: #{tpu_custom_call.1} parent=1 // pred_region
      %s54 = ssub.s32 24576, 24576
      %55 = vsyncadd [#allocation11], %s54
      %s56 = sshll.u32 [#allocation10], 4
      %s57 = int_to_ptr.vmem [resolvable:$true] %s56
      %62 = dma.hbm_to_vmem [thread:$0]  %s4, 24576, %s57, [#allocation11], 384, 384, 24
    $region21: #{tpu_custom_call.1} parent=1 // pred_fallthru
      _
    // Predicated region
    $region22: #{tpu_custom_call.1} parent=1 // pred_check
      _
    $region23: #{tpu_custom_call.1} parent=1 // pred_check_branch
      %64 = sbr.rel (0) target = $region25
    $region24: #{tpu_custom_call.1} parent=1 // pred_region
      %s66 = ssub.s32 48, 48
      %67 = vsyncadd [#allocation11], %s66
      %s69 = sshll.u32 [#allocation12], 4
      %s70 = int_to_ptr.vmem [resolvable:$true] %s69
      %72 = dma.hbm_to_vmem [thread:$0]  %s5, 48, %s70, [#allocation11]
    $region25: #{tpu_custom_call.1} parent=1 // pred_fallthru
      _
    // Predicated region
    $region26: #{tpu_custom_call.1} parent=1 // pred_check
      _
    $region27: #{tpu_custom_call.1} parent=1 // pred_check_branch
      %74 = sbr.rel (0) target = $region29
    $region28: #{tpu_custom_call.1} parent=1 // pred_region
      %75 = dma.done [#allocation5], 8192
    $region29: #{tpu_custom_call.1} parent=1 // pred_fallthru
      _
    // Predicated region
    $region30: #{tpu_custom_call.1} parent=1 // pred_check
      _
    $region31: #{tpu_custom_call.1} parent=1 // pred_check_branch
      %77 = sbr.rel (0) target = $region33
    $region32: #{tpu_custom_call.1} parent=1 // pred_region
      %78 = dma.done [#allocation8], 65536
    $region33: #{tpu_custom_call.1} parent=1 // pred_fallthru
      _
    // Predicated region
    $region34: #{tpu_custom_call.1} parent=1 // pred_check
      _
    $region35: #{tpu_custom_call.1} parent=1 // pred_check_branch
      %80 = sbr.rel (0) target = $region37
    $region36: #{tpu_custom_call.1} parent=1 // pred_region
      %81 = dma.done [#allocation8], 64
    $region37: #{tpu_custom_call.1} parent=1 // pred_fallthru
      _
    // Predicated region
    $region38: #{tpu_custom_call.1} parent=1 // pred_check
      _
    $region39: #{tpu_custom_call.1} parent=1 // pred_check_branch
      %83 = sbr.rel (0) target = $region41
    $region40: #{tpu_custom_call.1} parent=1 // pred_region
      %84 = dma.done [#allocation11], 24576
    $region41: #{tpu_custom_call.1} parent=1 // pred_fallthru
      _
    // Predicated region
    $region42: #{tpu_custom_call.1} parent=1 // pred_check
      _
    $region43: #{tpu_custom_call.1} parent=1 // pred_check_branch
      %86 = sbr.rel (0) target = $region45
    $region44: #{tpu_custom_call.1} parent=1 // pred_region
      %87 = dma.done [#allocation11], 48
    $region45: #{tpu_custom_call.1} parent=1 // pred_fallthru
      _
    %p88 = scmp.eq.s32.totalorder 0, 0
    // Predicated region
    $region46: #{tpu_custom_call.1} parent=1 // pred_check
      %p89 = pneg %p88
    $region47: #{tpu_custom_call.1} parent=1 // pred_check_branch
      %91 = sbr.rel (%p89) target = $region49
    $region48: #{tpu_custom_call.1} parent=1 // pred_region
      %92 = vst [vmem:[#allocation2] sm:$0xff] 0.0
      %93 = vst [vmem:[#allocation2 + $0x8] sm:$0xff] 0.0
      %94 = vst [vmem:[#allocation2 + $0x10] sm:$0xff] 0.0
      %95 = vst [vmem:[#allocation2 + $0x18] sm:$0xff] 0.0
      %96 = vst [vmem:[#allocation2 + $0x20] sm:$0xff] 0.0
      %97 = vst [vmem:[#allocation2 + $0x28] sm:$0xff] 0.0
      %98 = vst [vmem:[#allocation2 + $0x30] sm:$0xff] 0.0
      %99 = vst [vmem:[#allocation2 + $0x38] sm:$0xff] 0.0
      %vm100 = vcmask 7168
      %101 = vst.msk [vmem:[#allocation3] sm:$0xff] %vm100, 0.0
    $region49: #{tpu_custom_call.1} parent=1 // pred_fallthru
      _
    %v102 = vld [vmem:[#allocation4] sm:$0xff]
    %v103 = vld [vmem:[#allocation4 + $0x8] sm:$0xff]
    %v104 = vld [vmem:[#allocation4 + $0x10] sm:$0xff]
    %v105 = vld [vmem:[#allocation4 + $0x18] sm:$0xff]
    %v106 = vld [vmem:[#allocation4 + $0x20] sm:$0xff]
    %v107 = vld [vmem:[#allocation4 + $0x28] sm:$0xff]
    %v108 = vld [vmem:[#allocation4 + $0x30] sm:$0xff]
    %v109 = vld [vmem:[#allocation4 + $0x38] sm:$0xff]
    %v110 = vld [vmem:[#allocation4 + $0x40] sm:$0xff]
    %v111 = vld [vmem:[#allocation4 + $0x48] sm:$0xff]
    %v112 = vld [vmem:[#allocation4 + $0x50] sm:$0xff]
    %v113 = vld [vmem:[#allocation4 + $0x58] sm:$0xff]
    %v114 = vld [vmem:[#allocation4 + $0x60] sm:$0xff]
    %v115 = vld [vmem:[#allocation4 + $0x68] sm:$0xff]
    %v116 = vld [vmem:[#allocation4 + $0x70] sm:$0xff]
    %v117 = vld [vmem:[#allocation4 + $0x78] sm:$0xff]
    %v118 = vld [vmem:[#allocation4 + $0x80] sm:$0xff]
    %v119 = vld [vmem:[#allocation4 + $0x88] sm:$0xff]
    %v120 = vld [vmem:[#allocation4 + $0x90] sm:$0xff]
    %v121 = vld [vmem:[#allocation4 + $0x98] sm:$0xff]
    %v122 = vld [vmem:[#allocation4 + $0xa0] sm:$0xff]
    %v123 = vld [vmem:[#allocation4 + $0xa8] sm:$0xff]
    %v124 = vld [vmem:[#allocation4 + $0xb0] sm:$0xff]
    %v125 = vld [vmem:[#allocation4 + $0xb8] sm:$0xff]
    %v126 = vld [vmem:[#allocation4 + $0xc0] sm:$0xff]
    %v127 = vld [vmem:[#allocation4 + $0xc8] sm:$0xff]
    %v128 = vld [vmem:[#allocation4 + $0xd0] sm:$0xff]
    %v129 = vld [vmem:[#allocation4 + $0xd8] sm:$0xff]
    %v130 = vld [vmem:[#allocation4 + $0xe0] sm:$0xff]
    %v131 = vld [vmem:[#allocation4 + $0xe8] sm:$0xff]
    %v132 = vld [vmem:[#allocation4 + $0xf0] sm:$0xff]
    %v133 = vld [vmem:[#allocation4 + $0xf8] sm:$0xff]
    %v134 = vld [vmem:[#allocation4 + $0x100] sm:$0xff]
    %v135 = vld [vmem:[#allocation4 + $0x108] sm:$0xff]
    %v136 = vld [vmem:[#allocation4 + $0x110] sm:$0xff]
    %v137 = vld [vmem:[#allocation4 + $0x118] sm:$0xff]
    %v138 = vld [vmem:[#allocation4 + $0x120] sm:$0xff]
    %v139 = vld [vmem:[#allocation4 + $0x128] sm:$0xff]
    %v140 = vld [vmem:[#allocation4 + $0x130] sm:$0xff]
    %v141 = vld [vmem:[#allocation4 + $0x138] sm:$0xff]
    %v142 = vld [vmem:[#allocation4 + $0x140] sm:$0xff]
    %v143 = vld [vmem:[#allocation4 + $0x148] sm:$0xff]
    %v144 = vld [vmem:[#allocation4 + $0x150] sm:$0xff]
    %v145 = vld [vmem:[#allocation4 + $0x158] sm:$0xff]
    %v146 = vld [vmem:[#allocation4 + $0x160] sm:$0xff]
    %v147 = vld [vmem:[#allocation4 + $0x168] sm:$0xff]
    %v148 = vld [vmem:[#allocation4 + $0x170] sm:$0xff]
    %v149 = vld [vmem:[#allocation4 + $0x178] sm:$0xff]
    %v150 = vld [vmem:[#allocation4 + $0x180] sm:$0xff]
    %v151 = vld [vmem:[#allocation4 + $0x188] sm:$0xff]
    %v152 = vld [vmem:[#allocation4 + $0x190] sm:$0xff]
    %v153 = vld [vmem:[#allocation4 + $0x198] sm:$0xff]
    %v154 = vld [vmem:[#allocation4 + $0x1a0] sm:$0xff]
    %v155 = vld [vmem:[#allocation4 + $0x1a8] sm:$0xff]
    %v156 = vld [vmem:[#allocation4 + $0x1b0] sm:$0xff]
    %v157 = vld [vmem:[#allocation4 + $0x1b8] sm:$0xff]
    %v158 = vld [vmem:[#allocation4 + $0x1c0] sm:$0xff]
    %v159 = vld [vmem:[#allocation4 + $0x1c8] sm:$0xff]
    %v160 = vld [vmem:[#allocation4 + $0x1d0] sm:$0xff]
    %v161 = vld [vmem:[#allocation4 + $0x1d8] sm:$0xff]
    %v162 = vld [vmem:[#allocation4 + $0x1e0] sm:$0xff]
    %v163 = vld [vmem:[#allocation4 + $0x1e8] sm:$0xff]
    %v164 = vld [vmem:[#allocation4 + $0x1f0] sm:$0xff]
    %v165 = vld [vmem:[#allocation4 + $0x1f8] sm:$0xff]
    %v166 = vld [vmem:[%s1] sm:$0xff]
    %v167 = vld [vmem:[%s1 + $0x8] sm:$0xff]
    %v168 = vld [vmem:[%s1 + $0x10] sm:$0xff]
    %v169 = vld [vmem:[%s1 + $0x18] sm:$0xff]
    %v170 = vld [vmem:[%s1 + $0x20] sm:$0xff]
    %v171 = vld [vmem:[%s1 + $0x28] sm:$0xff]
    %v172 = vld [vmem:[%s1 + $0x30] sm:$0xff]
    %v173 = vld [vmem:[%s1 + $0x38] sm:$0xff]
    %v174 = vld [vmem:[#allocation2] sm:$0xff]
    %v175 = vld [vmem:[#allocation2 + $0x8] sm:$0xff]
    %v176 = vld [vmem:[#allocation2 + $0x10] sm:$0xff]
    %v177 = vld [vmem:[#allocation2 + $0x18] sm:$0xff]
    %v178 = vld [vmem:[#allocation2 + $0x20] sm:$0xff]
    %v179 = vld [vmem:[#allocation2 + $0x28] sm:$0xff]
    %v180 = vld [vmem:[#allocation2 + $0x30] sm:$0xff]
    %v181 = vld [vmem:[#allocation2 + $0x38] sm:$0xff]
    %183 = vset.pattern.permute.xlu0 0
    %184 = vperm.xlu0 %183, %v166
    %v185 = vpop.permute.xlu0 %184
    %188 = vset.pattern.permute.xlu0 0
    %189 = vperm.xlu0 %188, %v167
    %v190 = vpop.permute.xlu0 %189
    %193 = vset.pattern.permute.xlu0 0
    %194 = vperm.xlu0 %193, %v168
    %v195 = vpop.permute.xlu0 %194
    %198 = vset.pattern.permute.xlu0 0
    %199 = vperm.xlu0 %198, %v169
    %v200 = vpop.permute.xlu0 %199
    %203 = vset.pattern.permute.xlu0 0
    %204 = vperm.xlu0 %203, %v170
    %v205 = vpop.permute.xlu0 %204
    %208 = vset.pattern.permute.xlu0 0
    %209 = vperm.xlu0 %208, %v171
    %v210 = vpop.permute.xlu0 %209
    %213 = vset.pattern.permute.xlu0 0
    %214 = vperm.xlu0 %213, %v172
    %v215 = vpop.permute.xlu0 %214
    %218 = vset.pattern.permute.xlu0 0
    %219 = vperm.xlu0 %218, %v173
    %v220 = vpop.permute.xlu0 %219
    %v222 = vmul.f32 %v102, %v185
    %v223 = vmul.f32 %v103, %v185
    %v224 = vmul.f32 %v104, %v185
    %v225 = vmul.f32 %v105, %v185
    %v226 = vmul.f32 %v106, %v185
    %v227 = vmul.f32 %v107, %v185
    %v228 = vmul.f32 %v108, %v185
    %v229 = vmul.f32 %v109, %v185
    %v230 = vmul.f32 %v110, %v190
    %v231 = vmul.f32 %v111, %v190
    %v232 = vmul.f32 %v112, %v190
    %v233 = vmul.f32 %v113, %v190
    %v234 = vmul.f32 %v114, %v190
    %v235 = vmul.f32 %v115, %v190
    %v236 = vmul.f32 %v116, %v190
    %v237 = vmul.f32 %v117, %v190
    %v238 = vmul.f32 %v118, %v195
    %v239 = vmul.f32 %v119, %v195
    %v240 = vmul.f32 %v120, %v195
    %v241 = vmul.f32 %v121, %v195
    %v242 = vmul.f32 %v122, %v195
    %v243 = vmul.f32 %v123, %v195
    %v244 = vmul.f32 %v124, %v195
    %v245 = vmul.f32 %v125, %v195
    %v246 = vmul.f32 %v126, %v200
    %v247 = vmul.f32 %v127, %v200
    %v248 = vmul.f32 %v128, %v200
    %v249 = vmul.f32 %v129, %v200
    %v250 = vmul.f32 %v130, %v200
    %v251 = vmul.f32 %v131, %v200
    %v252 = vmul.f32 %v132, %v200
    %v253 = vmul.f32 %v133, %v200
    %v254 = vmul.f32 %v134, %v205
    %v255 = vmul.f32 %v135, %v205
    %v256 = vmul.f32 %v136, %v205
    %v257 = vmul.f32 %v137, %v205
    %v258 = vmul.f32 %v138, %v205
    %v259 = vmul.f32 %v139, %v205
    %v260 = vmul.f32 %v140, %v205
    %v261 = vmul.f32 %v141, %v205
    %v262 = vmul.f32 %v142, %v210
    %v263 = vmul.f32 %v143, %v210
    %v264 = vmul.f32 %v144, %v210
    %v265 = vmul.f32 %v145, %v210
    %v266 = vmul.f32 %v146, %v210
    %v267 = vmul.f32 %v147, %v210
    %v268 = vmul.f32 %v148, %v210
    %v269 = vmul.f32 %v149, %v210
    %v270 = vmul.f32 %v150, %v215
    %v271 = vmul.f32 %v151, %v215
    %v272 = vmul.f32 %v152, %v215
    %v273 = vmul.f32 %v153, %v215
    %v274 = vmul.f32 %v154, %v215
    %v275 = vmul.f32 %v155, %v215
    %v276 = vmul.f32 %v156, %v215
    %v277 = vmul.f32 %v157, %v215
    %v278 = vmul.f32 %v158, %v220
    %v279 = vmul.f32 %v159, %v220
    %v280 = vmul.f32 %v160, %v220
    %v281 = vmul.f32 %v161, %v220
    %v282 = vmul.f32 %v162, %v220
    %v283 = vmul.f32 %v163, %v220
    %v284 = vmul.f32 %v164, %v220
    %v285 = vmul.f32 %v165, %v220
    %v286 = vrot.slane %v222, 4
    %v287 = vadd.f32 %v222, %v286
    %v288 = vrot.slane %v287, 2
    %v289 = vadd.f32 %v287, %v288
    %v290 = vrot.slane %v289, 1
    %v291 = vadd.f32 %v289, %v290
    %v292 = vrot.slane %v223, 4
    %v293 = vadd.f32 %v223, %v292
    %v294 = vrot.slane %v293, 2
    %v295 = vadd.f32 %v293, %v294
    %v296 = vrot.slane %v295, 1
    %v297 = vadd.f32 %v295, %v296
    %v298 = vrot.slane %v224, 4
    %v299 = vadd.f32 %v224, %v298
    %v300 = vrot.slane %v299, 2
    %v301 = vadd.f32 %v299, %v300
    %v302 = vrot.slane %v301, 1
    %v303 = vadd.f32 %v301, %v302
    %v304 = vrot.slane %v225, 4
    %v305 = vadd.f32 %v225, %v304
    %v306 = vrot.slane %v305, 2
    %v307 = vadd.f32 %v305, %v306
    %v308 = vrot.slane %v307, 1
    %v309 = vadd.f32 %v307, %v308
    %v310 = vrot.slane %v226, 4
    %v311 = vadd.f32 %v226, %v310
    %v312 = vrot.slane %v311, 2
    %v313 = vadd.f32 %v311, %v312
    %v314 = vrot.slane %v313, 1
    %v315 = vadd.f32 %v313, %v314
    %v316 = vrot.slane %v227, 4
    %v317 = vadd.f32 %v227, %v316
    %v318 = vrot.slane %v317, 2
    %v319 = vadd.f32 %v317, %v318
    %v320 = vrot.slane %v319, 1
    %v321 = vadd.f32 %v319, %v320
    %v322 = vrot.slane %v228, 4
    %v323 = vadd.f32 %v228, %v322
    %v324 = vrot.slane %v323, 2
    %v325 = vadd.f32 %v323, %v324
    %v326 = vrot.slane %v325, 1
    %v327 = vadd.f32 %v325, %v326
    %v328 = vrot.slane %v229, 4
    %v329 = vadd.f32 %v229, %v328
    %v330 = vrot.slane %v329, 2
    %v331 = vadd.f32 %v329, %v330
    %v332 = vrot.slane %v331, 1
    %v333 = vadd.f32 %v331, %v332
    %v334 = vrot.slane %v230, 4
    %v335 = vadd.f32 %v230, %v334
    %v336 = vrot.slane %v335, 2
    %v337 = vadd.f32 %v335, %v336
    %v338 = vrot.slane %v337, 1
    %v339 = vadd.f32 %v337, %v338
    %v340 = vrot.slane %v231, 4
    %v341 = vadd.f32 %v231, %v340
    %v342 = vrot.slane %v341, 2
    %v343 = vadd.f32 %v341, %v342
    %v344 = vrot.slane %v343, 1
    %v345 = vadd.f32 %v343, %v344
    %v346 = vrot.slane %v232, 4
    %v347 = vadd.f32 %v232, %v346
    %v348 = vrot.slane %v347, 2
    %v349 = vadd.f32 %v347, %v348
    %v350 = vrot.slane %v349, 1
    %v351 = vadd.f32 %v349, %v350
    %v352 = vrot.slane %v233, 4
    %v353 = vadd.f32 %v233, %v352
    %v354 = vrot.slane %v353, 2
    %v355 = vadd.f32 %v353, %v354
    %v356 = vrot.slane %v355, 1
    %v357 = vadd.f32 %v355, %v356
    %v358 = vrot.slane %v234, 4
    %v359 = vadd.f32 %v234, %v358
    %v360 = vrot.slane %v359, 2
    %v361 = vadd.f32 %v359, %v360
    %v362 = vrot.slane %v361, 1
    %v363 = vadd.f32 %v361, %v362
    %v364 = vrot.slane %v235, 4
    %v365 = vadd.f32 %v235, %v364
    %v366 = vrot.slane %v365, 2
    %v367 = vadd.f32 %v365, %v366
    %v368 = vrot.slane %v367, 1
    %v369 = vadd.f32 %v367, %v368
    %v370 = vrot.slane %v236, 4
    %v371 = vadd.f32 %v236, %v370
    %v372 = vrot.slane %v371, 2
    %v373 = vadd.f32 %v371, %v372
    %v374 = vrot.slane %v373, 1
    %v375 = vadd.f32 %v373, %v374
    %v376 = vrot.slane %v237, 4
    %v377 = vadd.f32 %v237, %v376
    %v378 = vrot.slane %v377, 2
    %v379 = vadd.f32 %v377, %v378
    %v380 = vrot.slane %v379, 1
    %v381 = vadd.f32 %v379, %v380
    %v382 = vrot.slane %v238, 4
    %v383 = vadd.f32 %v238, %v382
    %v384 = vrot.slane %v383, 2
    %v385 = vadd.f32 %v383, %v384
    %v386 = vrot.slane %v385, 1
    %v387 = vadd.f32 %v385, %v386
    %v388 = vrot.slane %v239, 4
    %v389 = vadd.f32 %v239, %v388
    %v390 = vrot.slane %v389, 2
    %v391 = vadd.f32 %v389, %v390
    %v392 = vrot.slane %v391, 1
    %v393 = vadd.f32 %v391, %v392
    %v394 = vrot.slane %v240, 4
    %v395 = vadd.f32 %v240, %v394
    %v396 = vrot.slane %v395, 2
    %v397 = vadd.f32 %v395, %v396
    %v398 = vrot.slane %v397, 1
    %v399 = vadd.f32 %v397, %v398
    %v400 = vrot.slane %v241, 4
    %v401 = vadd.f32 %v241, %v400
    %v402 = vrot.slane %v401, 2
    %v403 = vadd.f32 %v401, %v402
    %v404 = vrot.slane %v403, 1
    %v405 = vadd.f32 %v403, %v404
    %v406 = vrot.slane %v242, 4
    %v407 = vadd.f32 %v242, %v406
    %v408 = vrot.slane %v407, 2
    %v409 = vadd.f32 %v407, %v408
    %v410 = vrot.slane %v409, 1
    %v411 = vadd.f32 %v409, %v410
    %v412 = vrot.slane %v243, 4
    %v413 = vadd.f32 %v243, %v412
    %v414 = vrot.slane %v413, 2
    %v415 = vadd.f32 %v413, %v414
    %v416 = vrot.slane %v415, 1
    %v417 = vadd.f32 %v415, %v416
    %v418 = vrot.slane %v244, 4
    %v419 = vadd.f32 %v244, %v418
    %v420 = vrot.slane %v419, 2
    %v421 = vadd.f32 %v419, %v420
    %v422 = vrot.slane %v421, 1
    %v423 = vadd.f32 %v421, %v422
    %v424 = vrot.slane %v245, 4
    %v425 = vadd.f32 %v245, %v424
    %v426 = vrot.slane %v425, 2
    %v427 = vadd.f32 %v425, %v426
    %v428 = vrot.slane %v427, 1
    %v429 = vadd.f32 %v427, %v428
    %v430 = vrot.slane %v246, 4
    %v431 = vadd.f32 %v246, %v430
    %v432 = vrot.slane %v431, 2
    %v433 = vadd.f32 %v431, %v432
    %v434 = vrot.slane %v433, 1
    %v435 = vadd.f32 %v433, %v434
    %v436 = vrot.slane %v247, 4
    %v437 = vadd.f32 %v247, %v436
    %v438 = vrot.slane %v437, 2
    %v439 = vadd.f32 %v437, %v438
    %v440 = vrot.slane %v439, 1
    %v441 = vadd.f32 %v439, %v440
    %v442 = vrot.slane %v248, 4
    %v443 = vadd.f32 %v248, %v442
    %v444 = vrot.slane %v443, 2
    %v445 = vadd.f32 %v443, %v444
    %v446 = vrot.slane %v445, 1
    %v447 = vadd.f32 %v445, %v446
    %v448 = vrot.slane %v249, 4
    %v449 = vadd.f32 %v249, %v448
    %v450 = vrot.slane %v449, 2
    %v451 = vadd.f32 %v449, %v450
    %v452 = vrot.slane %v451, 1
    %v453 = vadd.f32 %v451, %v452
    %v454 = vrot.slane %v250, 4
    %v455 = vadd.f32 %v250, %v454
    %v456 = vrot.slane %v455, 2
    %v457 = vadd.f32 %v455, %v456
    %v458 = vrot.slane %v457, 1
    %v459 = vadd.f32 %v457, %v458
    %v460 = vrot.slane %v251, 4
    %v461 = vadd.f32 %v251, %v460
    %v462 = vrot.slane %v461, 2
    %v463 = vadd.f32 %v461, %v462
    %v464 = vrot.slane %v463, 1
    %v465 = vadd.f32 %v463, %v464
    %v466 = vrot.slane %v252, 4
    %v467 = vadd.f32 %v252, %v466
    %v468 = vrot.slane %v467, 2
    %v469 = vadd.f32 %v467, %v468
    %v470 = vrot.slane %v469, 1
    %v471 = vadd.f32 %v469, %v470
    %v472 = vrot.slane %v253, 4
    %v473 = vadd.f32 %v253, %v472
    %v474 = vrot.slane %v473, 2
    %v475 = vadd.f32 %v473, %v474
    %v476 = vrot.slane %v475, 1
    %v477 = vadd.f32 %v475, %v476
    %v478 = vrot.slane %v254, 4
    %v479 = vadd.f32 %v254, %v478
    %v480 = vrot.slane %v479, 2
    %v481 = vadd.f32 %v479, %v480
    %v482 = vrot.slane %v481, 1
    %v483 = vadd.f32 %v481, %v482
    %v484 = vrot.slane %v255, 4
    %v485 = vadd.f32 %v255, %v484
    %v486 = vrot.slane %v485, 2
    %v487 = vadd.f32 %v485, %v486
    %v488 = vrot.slane %v487, 1
    %v489 = vadd.f32 %v487, %v488
    %v490 = vrot.slane %v256, 4
    %v491 = vadd.f32 %v256, %v490
    %v492 = vrot.slane %v491, 2
    %v493 = vadd.f32 %v491, %v492
    %v494 = vrot.slane %v493, 1
    %v495 = vadd.f32 %v493, %v494
    %v496 = vrot.slane %v257, 4
    %v497 = vadd.f32 %v257, %v496
    %v498 = vrot.slane %v497, 2
    %v499 = vadd.f32 %v497, %v498
    %v500 = vrot.slane %v499, 1
    %v501 = vadd.f32 %v499, %v500
    %v502 = vrot.slane %v258, 4
    %v503 = vadd.f32 %v258, %v502
    %v504 = vrot.slane %v503, 2
    %v505 = vadd.f32 %v503, %v504
    %v506 = vrot.slane %v505, 1
    %v507 = vadd.f32 %v505, %v506
    %v508 = vrot.slane %v259, 4
    %v509 = vadd.f32 %v259, %v508
    %v510 = vrot.slane %v509, 2
    %v511 = vadd.f32 %v509, %v510
    %v512 = vrot.slane %v511, 1
    %v513 = vadd.f32 %v511, %v512
    %v514 = vrot.slane %v260, 4
    %v515 = vadd.f32 %v260, %v514
    %v516 = vrot.slane %v515, 2
    %v517 = vadd.f32 %v515, %v516
    %v518 = vrot.slane %v517, 1
    %v519 = vadd.f32 %v517, %v518
    %v520 = vrot.slane %v261, 4
    %v521 = vadd.f32 %v261, %v520
    %v522 = vrot.slane %v521, 2
    %v523 = vadd.f32 %v521, %v522
    %v524 = vrot.slane %v523, 1
    %v525 = vadd.f32 %v523, %v524
    %v526 = vrot.slane %v262, 4
    %v527 = vadd.f32 %v262, %v526
    %v528 = vrot.slane %v527, 2
    %v529 = vadd.f32 %v527, %v528
    %v530 = vrot.slane %v529, 1
    %v531 = vadd.f32 %v529, %v530
    %v532 = vrot.slane %v263, 4
    %v533 = vadd.f32 %v263, %v532
    %v534 = vrot.slane %v533, 2
    %v535 = vadd.f32 %v533, %v534
    %v536 = vrot.slane %v535, 1
    %v537 = vadd.f32 %v535, %v536
    %v538 = vrot.slane %v264, 4
    %v539 = vadd.f32 %v264, %v538
    %v540 = vrot.slane %v539, 2
    %v541 = vadd.f32 %v539, %v540
    %v542 = vrot.slane %v541, 1
    %v543 = vadd.f32 %v541, %v542
    %v544 = vrot.slane %v265, 4
    %v545 = vadd.f32 %v265, %v544
    %v546 = vrot.slane %v545, 2
    %v547 = vadd.f32 %v545, %v546
    %v548 = vrot.slane %v547, 1
    %v549 = vadd.f32 %v547, %v548
    %v550 = vrot.slane %v266, 4
    %v551 = vadd.f32 %v266, %v550
    %v552 = vrot.slane %v551, 2
    %v553 = vadd.f32 %v551, %v552
    %v554 = vrot.slane %v553, 1
    %v555 = vadd.f32 %v553, %v554
    %v556 = vrot.slane %v267, 4
    %v557 = vadd.f32 %v267, %v556
    %v558 = vrot.slane %v557, 2
    %v559 = vadd.f32 %v557, %v558
    %v560 = vrot.slane %v559, 1
    %v561 = vadd.f32 %v559, %v560
    %v562 = vrot.slane %v268, 4
    %v563 = vadd.f32 %v268, %v562
    %v564 = vrot.slane %v563, 2
    %v565 = vadd.f32 %v563, %v564
    %v566 = vrot.slane %v565, 1
    %v567 = vadd.f32 %v565, %v566
    %v568 = vrot.slane %v269, 4
    %v569 = vadd.f32 %v269, %v568
    %v570 = vrot.slane %v569, 2
    %v571 = vadd.f32 %v569, %v570
    %v572 = vrot.slane %v571, 1
    %v573 = vadd.f32 %v571, %v572
    %v574 = vrot.slane %v270, 4
    %v575 = vadd.f32 %v270, %v574
    %v576 = vrot.slane %v575, 2
    %v577 = vadd.f32 %v575, %v576
    %v578 = vrot.slane %v577, 1
    %v579 = vadd.f32 %v577, %v578
    %v580 = vrot.slane %v271, 4
    %v581 = vadd.f32 %v271, %v580
    %v582 = vrot.slane %v581, 2
    %v583 = vadd.f32 %v581, %v582
    %v584 = vrot.slane %v583, 1
    %v585 = vadd.f32 %v583, %v584
    %v586 = vrot.slane %v272, 4
    %v587 = vadd.f32 %v272, %v586
    %v588 = vrot.slane %v587, 2
    %v589 = vadd.f32 %v587, %v588
    %v590 = vrot.slane %v589, 1
    %v591 = vadd.f32 %v589, %v590
    %v592 = vrot.slane %v273, 4
    %v593 = vadd.f32 %v273, %v592
    %v594 = vrot.slane %v593, 2
    %v595 = vadd.f32 %v593, %v594
    %v596 = vrot.slane %v595, 1
    %v597 = vadd.f32 %v595, %v596
    %v598 = vrot.slane %v274, 4
    %v599 = vadd.f32 %v274, %v598
    %v600 = vrot.slane %v599, 2
    %v601 = vadd.f32 %v599, %v600
    %v602 = vrot.slane %v601, 1
    %v603 = vadd.f32 %v601, %v602
    %v604 = vrot.slane %v275, 4
    %v605 = vadd.f32 %v275, %v604
    %v606 = vrot.slane %v605, 2
    %v607 = vadd.f32 %v605, %v606
    %v608 = vrot.slane %v607, 1
    %v609 = vadd.f32 %v607, %v608
    %v610 = vrot.slane %v276, 4
    %v611 = vadd.f32 %v276, %v610
    %v612 = vrot.slane %v611, 2
    %v613 = vadd.f32 %v611, %v612
    %v614 = vrot.slane %v613, 1
    %v615 = vadd.f32 %v613, %v614
    %v616 = vrot.slane %v277, 4
    %v617 = vadd.f32 %v277, %v616
    %v618 = vrot.slane %v617, 2
    %v619 = vadd.f32 %v617, %v618
    %v620 = vrot.slane %v619, 1
    %v621 = vadd.f32 %v619, %v620
    %v622 = vrot.slane %v278, 4
    %v623 = vadd.f32 %v278, %v622
    %v624 = vrot.slane %v623, 2
    %v625 = vadd.f32 %v623, %v624
    %v626 = vrot.slane %v625, 1
    %v627 = vadd.f32 %v625, %v626
    %v628 = vrot.slane %v279, 4
    %v629 = vadd.f32 %v279, %v628
    %v630 = vrot.slane %v629, 2
    %v631 = vadd.f32 %v629, %v630
    %v632 = vrot.slane %v631, 1
    %v633 = vadd.f32 %v631, %v632
    %v634 = vrot.slane %v280, 4
    %v635 = vadd.f32 %v280, %v634
    %v636 = vrot.slane %v635, 2
    %v637 = vadd.f32 %v635, %v636
    %v638 = vrot.slane %v637, 1
    %v639 = vadd.f32 %v637, %v638
    %v640 = vrot.slane %v281, 4
    %v641 = vadd.f32 %v281, %v640
    %v642 = vrot.slane %v641, 2
    %v643 = vadd.f32 %v641, %v642
    %v644 = vrot.slane %v643, 1
    %v645 = vadd.f32 %v643, %v644
    %v646 = vrot.slane %v282, 4
    %v647 = vadd.f32 %v282, %v646
    %v648 = vrot.slane %v647, 2
    %v649 = vadd.f32 %v647, %v648
    %v650 = vrot.slane %v649, 1
    %v651 = vadd.f32 %v649, %v650
    %v652 = vrot.slane %v283, 4
    %v653 = vadd.f32 %v283, %v652
    %v654 = vrot.slane %v653, 2
    %v655 = vadd.f32 %v653, %v654
    %v656 = vrot.slane %v655, 1
    %v657 = vadd.f32 %v655, %v656
    %v658 = vrot.slane %v284, 4
    %v659 = vadd.f32 %v284, %v658
    %v660 = vrot.slane %v659, 2
    %v661 = vadd.f32 %v659, %v660
    %v662 = vrot.slane %v661, 1
    %v663 = vadd.f32 %v661, %v662
    %v664 = vrot.slane %v285, 4
    %v665 = vadd.f32 %v285, %v664
    %v666 = vrot.slane %v665, 2
    %v667 = vadd.f32 %v665, %v666
    %v668 = vrot.slane %v667, 1
    %v669 = vadd.f32 %v667, %v668
    %vm734 = vcmask 1041409
    %v735 = vsel %vm734, %v339, %v291
    %vm736 = vcmask 1042434
    %v737 = vsel %vm736, %v387, %v735
    %vm738 = vcmask 1043459
    %v739 = vsel %vm738, %v435, %v737
    %vm740 = vcmask 1044484
    %v741 = vsel %vm740, %v483, %v739
    %vm742 = vcmask 1045509
    %v743 = vsel %vm742, %v531, %v741
    %vm744 = vcmask 1046534
    %v745 = vsel %vm744, %v579, %v743
    %vm746 = vcmask 1047559
    %v747 = vsel %vm746, %v627, %v745
    %v748 = vsel %vm734, %v345, %v297
    %v749 = vsel %vm736, %v393, %v748
    %v750 = vsel %vm738, %v441, %v749
    %v751 = vsel %vm740, %v489, %v750
    %v752 = vsel %vm742, %v537, %v751
    %v753 = vsel %vm744, %v585, %v752
    %v754 = vsel %vm746, %v633, %v753
    %v755 = vsel %vm734, %v351, %v303
    %v756 = vsel %vm736, %v399, %v755
    %v757 = vsel %vm738, %v447, %v756
    %v758 = vsel %vm740, %v495, %v757
    %v759 = vsel %vm742, %v543, %v758
    %v760 = vsel %vm744, %v591, %v759
    %v761 = vsel %vm746, %v639, %v760
    %v762 = vsel %vm734, %v357, %v309
    %v763 = vsel %vm736, %v405, %v762
    %v764 = vsel %vm738, %v453, %v763
    %v765 = vsel %vm740, %v501, %v764
    %v766 = vsel %vm742, %v549, %v765
    %v767 = vsel %vm744, %v597, %v766
    %v768 = vsel %vm746, %v645, %v767
    %v769 = vsel %vm734, %v363, %v315
    %v770 = vsel %vm736, %v411, %v769
    %v771 = vsel %vm738, %v459, %v770
    %v772 = vsel %vm740, %v507, %v771
    %v773 = vsel %vm742, %v555, %v772
    %v774 = vsel %vm744, %v603, %v773
    %v775 = vsel %vm746, %v651, %v774
    %v776 = vsel %vm734, %v369, %v321
    %v777 = vsel %vm736, %v417, %v776
    %v778 = vsel %vm738, %v465, %v777
    %v779 = vsel %vm740, %v513, %v778
    %v780 = vsel %vm742, %v561, %v779
    %v781 = vsel %vm744, %v609, %v780
    %v782 = vsel %vm746, %v657, %v781
    %v783 = vsel %vm734, %v375, %v327
    %v784 = vsel %vm736, %v423, %v783
    %v785 = vsel %vm738, %v471, %v784
    %v786 = vsel %vm740, %v519, %v785
    %v787 = vsel %vm742, %v567, %v786
    %v788 = vsel %vm744, %v615, %v787
    %v789 = vsel %vm746, %v663, %v788
    %v790 = vsel %vm734, %v381, %v333
    %v791 = vsel %vm736, %v429, %v790
    %v792 = vsel %vm738, %v477, %v791
    %v793 = vsel %vm740, %v525, %v792
    %v794 = vsel %vm742, %v573, %v793
    %v795 = vsel %vm744, %v621, %v794
    %v796 = vsel %vm746, %v669, %v795
    %v805 = vadd.f32 %v174, %v747
    %v806 = vadd.f32 %v175, %v754
    %v807 = vadd.f32 %v176, %v761
    %v808 = vadd.f32 %v177, %v768
    %v809 = vadd.f32 %v178, %v775
    %v810 = vadd.f32 %v179, %v782
    %v811 = vadd.f32 %v180, %v789
    %v812 = vadd.f32 %v181, %v796
    %813 = vst [vmem:[#allocation2] sm:$0xff] %v805
    %814 = vst [vmem:[#allocation2 + $0x8] sm:$0xff] %v806
    %815 = vst [vmem:[#allocation2 + $0x10] sm:$0xff] %v807
    %816 = vst [vmem:[#allocation2 + $0x18] sm:$0xff] %v808
    %817 = vst [vmem:[#allocation2 + $0x20] sm:$0xff] %v809
    %818 = vst [vmem:[#allocation2 + $0x28] sm:$0xff] %v810
    %819 = vst [vmem:[#allocation2 + $0x30] sm:$0xff] %v811
    %820 = vst [vmem:[#allocation2 + $0x38] sm:$0xff] %v812
    %v821 = vld [vmem:[#allocation3] sm:$0xff]
    %vm822 = vcmask 7168
    %v823 = vsel %vm822, %v166, 0.0
    %v824 = vrot.slane %v823, 4
    %v825 = vadd.f32 %v823, %v824
    %v826 = vrot.slane %v825, 2
    %v827 = vadd.f32 %v825, %v826
    %v828 = vrot.slane %v827, 1
    %v829 = vadd.f32 %v827, %v828
    %v830 = vsel %vm822, %v167, 0.0
    %v831 = vrot.slane %v830, 4
    %v832 = vadd.f32 %v830, %v831
    %v833 = vrot.slane %v832, 2
    %v834 = vadd.f32 %v832, %v833
    %v835 = vrot.slane %v834, 1
    %v836 = vadd.f32 %v834, %v835
    %v837 = vsel %vm822, %v168, 0.0
    %v838 = vrot.slane %v837, 4
    %v839 = vadd.f32 %v837, %v838
    %v840 = vrot.slane %v839, 2
    %v841 = vadd.f32 %v839, %v840
    %v842 = vrot.slane %v841, 1
    %v843 = vadd.f32 %v841, %v842
    %v844 = vsel %vm822, %v169, 0.0
    %v845 = vrot.slane %v844, 4
    %v846 = vadd.f32 %v844, %v845
    %v847 = vrot.slane %v846, 2
    %v848 = vadd.f32 %v846, %v847
    %v849 = vrot.slane %v848, 1
    %v850 = vadd.f32 %v848, %v849
    %v851 = vsel %vm822, %v170, 0.0
    %v852 = vrot.slane %v851, 4
    %v853 = vadd.f32 %v851, %v852
    %v854 = vrot.slane %v853, 2
    %v855 = vadd.f32 %v853, %v854
    %v856 = vrot.slane %v855, 1
    %v857 = vadd.f32 %v855, %v856
    %v858 = vsel %vm822, %v171, 0.0
    %v859 = vrot.slane %v858, 4
    %v860 = vadd.f32 %v858, %v859
    %v861 = vrot.slane %v860, 2
    %v862 = vadd.f32 %v860, %v861
    %v863 = vrot.slane %v862, 1
    %v864 = vadd.f32 %v862, %v863
    %v865 = vsel %vm822, %v172, 0.0
    %v866 = vrot.slane %v865, 4
    %v867 = vadd.f32 %v865, %v866
    %v868 = vrot.slane %v867, 2
    %v869 = vadd.f32 %v867, %v868
    %v870 = vrot.slane %v869, 1
    %v871 = vadd.f32 %v869, %v870
    %v872 = vsel %vm822, %v173, 0.0
    %v873 = vrot.slane %v872, 4
    %v874 = vadd.f32 %v872, %v873
    %v875 = vrot.slane %v874, 2
    %v876 = vadd.f32 %v874, %v875
    %v877 = vrot.slane %v876, 1
    %v878 = vadd.f32 %v876, %v877
    %v887 = vsel %vm734, %v836, %v829
    %v888 = vsel %vm736, %v843, %v887
    %v889 = vsel %vm738, %v850, %v888
    %v890 = vsel %vm740, %v857, %v889
    %v891 = vsel %vm742, %v864, %v890
    %v892 = vsel %vm744, %v871, %v891
    %v893 = vsel %vm746, %v878, %v892
    %v895 = vadd.f32 %v821, %v893
    %896 = vst.msk [vmem:[#allocation3] sm:$0xff] %vm822, %v895
    // Predicated region
    $region50: #{tpu_custom_call.1} parent=1 // pred_check
      %p897 = pneg %p88
    $region51: #{tpu_custom_call.1} parent=1 // pred_check_branch
      %899 = sbr.rel (%p897) target = $region53
    $region52: #{tpu_custom_call.1} parent=1 // pred_region
      %v900 = vld [vmem:[#allocation3] sm:$0xff]
      %v901 = vmax.f32 %v900, 1e-09
      %v902 = vrcp.pop %v901
      %v903 = vld [vmem:[#allocation2] sm:$0xff]
      %v904 = vld [vmem:[#allocation2 + $0x8] sm:$0xff]
      %v905 = vld [vmem:[#allocation2 + $0x10] sm:$0xff]
      %v906 = vld [vmem:[#allocation2 + $0x18] sm:$0xff]
      %v907 = vld [vmem:[#allocation2 + $0x20] sm:$0xff]
      %v908 = vld [vmem:[#allocation2 + $0x28] sm:$0xff]
      %v909 = vld [vmem:[#allocation2 + $0x30] sm:$0xff]
      %v910 = vld [vmem:[#allocation2 + $0x38] sm:$0xff]
      %912 = vset.pattern.permute.xlu0 0
      %913 = vperm.xlu0 %912, %v902
      %v914 = vpop.permute.xlu0 %913
      %v916 = vmul.f32 %v903, %v914
      %v917 = vmul.f32 %v904, %v914
      %v918 = vmul.f32 %v905, %v914
      %v919 = vmul.f32 %v906, %v914
      %v920 = vmul.f32 %v907, %v914
      %v921 = vmul.f32 %v908, %v914
      %v922 = vmul.f32 %v909, %v914
      %v923 = vmul.f32 %v910, %v914
      %v924 = vld [vmem:[#allocation7] sm:$0xff]
      %v925 = vld [vmem:[#allocation7 + $0x8] sm:$0xff]
      %v926 = vld [vmem:[#allocation7 + $0x10] sm:$0xff]
      %v927 = vld [vmem:[#allocation7 + $0x18] sm:$0xff]
      %v928 = vld [vmem:[#allocation7 + $0x20] sm:$0xff]
      %v929 = vld [vmem:[#allocation7 + $0x28] sm:$0xff]
      %v930 = vld [vmem:[#allocation7 + $0x30] sm:$0xff]
      %v931 = vld [vmem:[#allocation7 + $0x38] sm:$0xff]
      %v932 = vld [vmem:[#allocation7 + $0x40] sm:$0xff]
      %v933 = vld [vmem:[#allocation7 + $0x48] sm:$0xff]
      %v934 = vld [vmem:[#allocation7 + $0x50] sm:$0xff]
      %v935 = vld [vmem:[#allocation7 + $0x58] sm:$0xff]
      %v936 = vld [vmem:[#allocation7 + $0x60] sm:$0xff]
      %v937 = vld [vmem:[#allocation7 + $0x68] sm:$0xff]
      %v938 = vld [vmem:[#allocation7 + $0x70] sm:$0xff]
      %v939 = vld [vmem:[#allocation7 + $0x78] sm:$0xff]
      %v940 = vld [vmem:[#allocation7 + $0x80] sm:$0xff]
      %v941 = vld [vmem:[#allocation7 + $0x88] sm:$0xff]
      %v942 = vld [vmem:[#allocation7 + $0x90] sm:$0xff]
      %v943 = vld [vmem:[#allocation7 + $0x98] sm:$0xff]
      %v944 = vld [vmem:[#allocation7 + $0xa0] sm:$0xff]
      %v945 = vld [vmem:[#allocation7 + $0xa8] sm:$0xff]
      %v946 = vld [vmem:[#allocation7 + $0xb0] sm:$0xff]
      %v947 = vld [vmem:[#allocation7 + $0xb8] sm:$0xff]
      %v948 = vld [vmem:[#allocation7 + $0xc0] sm:$0xff]
      %v949 = vld [vmem:[#allocation7 + $0xc8] sm:$0xff]
      %v950 = vld [vmem:[#allocation7 + $0xd0] sm:$0xff]
      %v951 = vld [vmem:[#allocation7 + $0xd8] sm:$0xff]
      %v952 = vld [vmem:[#allocation7 + $0xe0] sm:$0xff]
      %v953 = vld [vmem:[#allocation7 + $0xe8] sm:$0xff]
      %v954 = vld [vmem:[#allocation7 + $0xf0] sm:$0xff]
      %v955 = vld [vmem:[#allocation7 + $0xf8] sm:$0xff]
      %v956 = vld [vmem:[#allocation7 + $0x100] sm:$0xff]
      %v957 = vld [vmem:[#allocation7 + $0x108] sm:$0xff]
      %v958 = vld [vmem:[#allocation7 + $0x110] sm:$0xff]
      %v959 = vld [vmem:[#allocation7 + $0x118] sm:$0xff]
      %v960 = vld [vmem:[#allocation7 + $0x120] sm:$0xff]
      %v961 = vld [vmem:[#allocation7 + $0x128] sm:$0xff]
      %v962 = vld [vmem:[#allocation7 + $0x130] sm:$0xff]
      %v963 = vld [vmem:[#allocation7 + $0x138] sm:$0xff]
      %v964 = vld [vmem:[#allocation7 + $0x140] sm:$0xff]
      %v965 = vld [vmem:[#allocation7 + $0x148] sm:$0xff]
      %v966 = vld [vmem:[#allocation7 + $0x150] sm:$0xff]
      %v967 = vld [vmem:[#allocation7 + $0x158] sm:$0xff]
      %v968 = vld [vmem:[#allocation7 + $0x160] sm:$0xff]
      %v969 = vld [vmem:[#allocation7 + $0x168] sm:$0xff]
      %v970 = vld [vmem:[#allocation7 + $0x170] sm:$0xff]
      %v971 = vld [vmem:[#allocation7 + $0x178] sm:$0xff]
      %v972 = vld [vmem:[#allocation7 + $0x180] sm:$0xff]
      %v973 = vld [vmem:[#allocation7 + $0x188] sm:$0xff]
      %v974 = vld [vmem:[#allocation7 + $0x190] sm:$0xff]
      %v975 = vld [vmem:[#allocation7 + $0x198] sm:$0xff]
      %v976 = vld [vmem:[#allocation7 + $0x1a0] sm:$0xff]
      %v977 = vld [vmem:[#allocation7 + $0x1a8] sm:$0xff]
      %v978 = vld [vmem:[#allocation7 + $0x1b0] sm:$0xff]
      %v979 = vld [vmem:[#allocation7 + $0x1b8] sm:$0xff]
      %v980 = vld [vmem:[#allocation7 + $0x1c0] sm:$0xff]
      %v981 = vld [vmem:[#allocation7 + $0x1c8] sm:$0xff]
      %v982 = vld [vmem:[#allocation7 + $0x1d0] sm:$0xff]
      %v983 = vld [vmem:[#allocation7 + $0x1d8] sm:$0xff]
      %v984 = vld [vmem:[#allocation7 + $0x1e0] sm:$0xff]
      %v985 = vld [vmem:[#allocation7 + $0x1e8] sm:$0xff]
      %v986 = vld [vmem:[#allocation7 + $0x1f0] sm:$0xff]
      %v987 = vld [vmem:[#allocation7 + $0x1f8] sm:$0xff]
      %v988 = vld [vmem:[#allocation7 + $0x200] sm:$0xff]
      %v989 = vld [vmem:[#allocation7 + $0x208] sm:$0xff]
      %v990 = vld [vmem:[#allocation7 + $0x210] sm:$0xff]
      %v991 = vld [vmem:[#allocation7 + $0x218] sm:$0xff]
      %v992 = vld [vmem:[#allocation7 + $0x220] sm:$0xff]
      %v993 = vld [vmem:[#allocation7 + $0x228] sm:$0xff]
      %v994 = vld [vmem:[#allocation7 + $0x230] sm:$0xff]
      %v995 = vld [vmem:[#allocation7 + $0x238] sm:$0xff]
      %v996 = vld [vmem:[#allocation7 + $0x240] sm:$0xff]
      %v997 = vld [vmem:[#allocation7 + $0x248] sm:$0xff]
      %v998 = vld [vmem:[#allocation7 + $0x250] sm:$0xff]
      %v999 = vld [vmem:[#allocation7 + $0x258] sm:$0xff]
      %v1000 = vld [vmem:[#allocation7 + $0x260] sm:$0xff]
      %v1001 = vld [vmem:[#allocation7 + $0x268] sm:$0xff]
      %v1002 = vld [vmem:[#allocation7 + $0x270] sm:$0xff]
      %v1003 = vld [vmem:[#allocation7 + $0x278] sm:$0xff]
      %v1004 = vld [vmem:[#allocation7 + $0x280] sm:$0xff]
      %v1005 = vld [vmem:[#allocation7 + $0x288] sm:$0xff]
      %v1006 = vld [vmem:[#allocation7 + $0x290] sm:$0xff]
      %v1007 = vld [vmem:[#allocation7 + $0x298] sm:$0xff]
      %v1008 = vld [vmem:[#allocation7 + $0x2a0] sm:$0xff]
      %v1009 = vld [vmem:[#allocation7 + $0x2a8] sm:$0xff]
      %v1010 = vld [vmem:[#allocation7 + $0x2b0] sm:$0xff]
      %v1011 = vld [vmem:[#allocation7 + $0x2b8] sm:$0xff]
      %v1012 = vld [vmem:[#allocation7 + $0x2c0] sm:$0xff]
      %v1013 = vld [vmem:[#allocation7 + $0x2c8] sm:$0xff]
      %v1014 = vld [vmem:[#allocation7 + $0x2d0] sm:$0xff]
      %v1015 = vld [vmem:[#allocation7 + $0x2d8] sm:$0xff]
      %v1016 = vld [vmem:[#allocation7 + $0x2e0] sm:$0xff]
      %v1017 = vld [vmem:[#allocation7 + $0x2e8] sm:$0xff]
      %v1018 = vld [vmem:[#allocation7 + $0x2f0] sm:$0xff]
      %v1019 = vld [vmem:[#allocation7 + $0x2f8] sm:$0xff]
      %v1020 = vld [vmem:[#allocation7 + $0x300] sm:$0xff]
      %v1021 = vld [vmem:[#allocation7 + $0x308] sm:$0xff]
      %v1022 = vld [vmem:[#allocation7 + $0x310] sm:$0xff]
      %v1023 = vld [vmem:[#allocation7 + $0x318] sm:$0xff]
      %v1024 = vld [vmem:[#allocation7 + $0x320] sm:$0xff]
      %v1025 = vld [vmem:[#allocation7 + $0x328] sm:$0xff]
      %v1026 = vld [vmem:[#allocation7 + $0x330] sm:$0xff]
      %v1027 = vld [vmem:[#allocation7 + $0x338] sm:$0xff]
      %v1028 = vld [vmem:[#allocation7 + $0x340] sm:$0xff]
      %v1029 = vld [vmem:[#allocation7 + $0x348] sm:$0xff]
      %v1030 = vld [vmem:[#allocation7 + $0x350] sm:$0xff]
      %v1031 = vld [vmem:[#allocation7 + $0x358] sm:$0xff]
      %v1032 = vld [vmem:[#allocation7 + $0x360] sm:$0xff]
      %v1033 = vld [vmem:[#allocation7 + $0x368] sm:$0xff]
      %v1034 = vld [vmem:[#allocation7 + $0x370] sm:$0xff]
      %v1035 = vld [vmem:[#allocation7 + $0x378] sm:$0xff]
      %v1036 = vld [vmem:[#allocation7 + $0x380] sm:$0xff]
      %v1037 = vld [vmem:[#allocation7 + $0x388] sm:$0xff]
      %v1038 = vld [vmem:[#allocation7 + $0x390] sm:$0xff]
      %v1039 = vld [vmem:[#allocation7 + $0x398] sm:$0xff]
      %v1040 = vld [vmem:[#allocation7 + $0x3a0] sm:$0xff]
      %v1041 = vld [vmem:[#allocation7 + $0x3a8] sm:$0xff]
      %v1042 = vld [vmem:[#allocation7 + $0x3b0] sm:$0xff]
      %v1043 = vld [vmem:[#allocation7 + $0x3b8] sm:$0xff]
      %v1044 = vld [vmem:[#allocation7 + $0x3c0] sm:$0xff]
      %v1045 = vld [vmem:[#allocation7 + $0x3c8] sm:$0xff]
      %v1046 = vld [vmem:[#allocation7 + $0x3d0] sm:$0xff]
      %v1047 = vld [vmem:[#allocation7 + $0x3d8] sm:$0xff]
      %v1048 = vld [vmem:[#allocation7 + $0x3e0] sm:$0xff]
      %v1049 = vld [vmem:[#allocation7 + $0x3e8] sm:$0xff]
      %v1050 = vld [vmem:[#allocation7 + $0x3f0] sm:$0xff]
      %v1051 = vld [vmem:[#allocation7 + $0x3f8] sm:$0xff]
      %v1052 = vld [vmem:[#allocation7 + $0x400] sm:$0xff]
      %v1053 = vld [vmem:[#allocation7 + $0x408] sm:$0xff]
      %v1054 = vld [vmem:[#allocation7 + $0x410] sm:$0xff]
      %v1055 = vld [vmem:[#allocation7 + $0x418] sm:$0xff]
      %v1056 = vld [vmem:[#allocation7 + $0x420] sm:$0xff]
      %v1057 = vld [vmem:[#allocation7 + $0x428] sm:$0xff]
      %v1058 = vld [vmem:[#allocation7 + $0x430] sm:$0xff]
      %v1059 = vld [vmem:[#allocation7 + $0x438] sm:$0xff]
      %v1060 = vld [vmem:[#allocation7 + $0x440] sm:$0xff]
      %v1061 = vld [vmem:[#allocation7 + $0x448] sm:$0xff]
      %v1062 = vld [vmem:[#allocation7 + $0x450] sm:$0xff]
      %v1063 = vld [vmem:[#allocation7 + $0x458] sm:$0xff]
      %v1064 = vld [vmem:[#allocation7 + $0x460] sm:$0xff]
      %v1065 = vld [vmem:[#allocation7 + $0x468] sm:$0xff]
      %v1066 = vld [vmem:[#allocation7 + $0x470] sm:$0xff]
      %v1067 = vld [vmem:[#allocation7 + $0x478] sm:$0xff]
      %v1068 = vld [vmem:[#allocation7 + $0x480] sm:$0xff]
      %v1069 = vld [vmem:[#allocation7 + $0x488] sm:$0xff]
      %v1070 = vld [vmem:[#allocation7 + $0x490] sm:$0xff]
      %v1071 = vld [vmem:[#allocation7 + $0x498] sm:$0xff]
      %v1072 = vld [vmem:[#allocation7 + $0x4a0] sm:$0xff]
      %v1073 = vld [vmem:[#allocation7 + $0x4a8] sm:$0xff]
      %v1074 = vld [vmem:[#allocation7 + $0x4b0] sm:$0xff]
      %v1075 = vld [vmem:[#allocation7 + $0x4b8] sm:$0xff]
      %v1076 = vld [vmem:[#allocation7 + $0x4c0] sm:$0xff]
      %v1077 = vld [vmem:[#allocation7 + $0x4c8] sm:$0xff]
      %v1078 = vld [vmem:[#allocation7 + $0x4d0] sm:$0xff]
      %v1079 = vld [vmem:[#allocation7 + $0x4d8] sm:$0xff]
      %v1080 = vld [vmem:[#allocation7 + $0x4e0] sm:$0xff]
      %v1081 = vld [vmem:[#allocation7 + $0x4e8] sm:$0xff]
      %v1082 = vld [vmem:[#allocation7 + $0x4f0] sm:$0xff]
      %v1083 = vld [vmem:[#allocation7 + $0x4f8] sm:$0xff]
      %v1084 = vld [vmem:[#allocation7 + $0x500] sm:$0xff]
      %v1085 = vld [vmem:[#allocation7 + $0x508] sm:$0xff]
      %v1086 = vld [vmem:[#allocation7 + $0x510] sm:$0xff]
      %v1087 = vld [vmem:[#allocation7 + $0x518] sm:$0xff]
      %v1088 = vld [vmem:[#allocation7 + $0x520] sm:$0xff]
      %v1089 = vld [vmem:[#allocation7 + $0x528] sm:$0xff]
      %v1090 = vld [vmem:[#allocation7 + $0x530] sm:$0xff]
      %v1091 = vld [vmem:[#allocation7 + $0x538] sm:$0xff]
      %v1092 = vld [vmem:[#allocation7 + $0x540] sm:$0xff]
      %v1093 = vld [vmem:[#allocation7 + $0x548] sm:$0xff]
      %v1094 = vld [vmem:[#allocation7 + $0x550] sm:$0xff]
      %v1095 = vld [vmem:[#allocation7 + $0x558] sm:$0xff]
      %v1096 = vld [vmem:[#allocation7 + $0x560] sm:$0xff]
      %v1097 = vld [vmem:[#allocation7 + $0x568] sm:$0xff]
      %v1098 = vld [vmem:[#allocation7 + $0x570] sm:$0xff]
      %v1099 = vld [vmem:[#allocation7 + $0x578] sm:$0xff]
      %v1100 = vld [vmem:[#allocation7 + $0x580] sm:$0xff]
      %v1101 = vld [vmem:[#allocation7 + $0x588] sm:$0xff]
      %v1102 = vld [vmem:[#allocation7 + $0x590] sm:$0xff]
      %v1103 = vld [vmem:[#allocation7 + $0x598] sm:$0xff]
      %v1104 = vld [vmem:[#allocation7 + $0x5a0] sm:$0xff]
      %v1105 = vld [vmem:[#allocation7 + $0x5a8] sm:$0xff]
      %v1106 = vld [vmem:[#allocation7 + $0x5b0] sm:$0xff]
      %v1107 = vld [vmem:[#allocation7 + $0x5b8] sm:$0xff]
      %v1108 = vld [vmem:[#allocation7 + $0x5c0] sm:$0xff]
      %v1109 = vld [vmem:[#allocation7 + $0x5c8] sm:$0xff]
      %v1110 = vld [vmem:[#allocation7 + $0x5d0] sm:$0xff]
      %v1111 = vld [vmem:[#allocation7 + $0x5d8] sm:$0xff]
      %v1112 = vld [vmem:[#allocation7 + $0x5e0] sm:$0xff]
      %v1113 = vld [vmem:[#allocation7 + $0x5e8] sm:$0xff]
      %v1114 = vld [vmem:[#allocation7 + $0x5f0] sm:$0xff]
      %v1115 = vld [vmem:[#allocation7 + $0x5f8] sm:$0xff]
      %v1116 = vld [vmem:[#allocation7 + $0x600] sm:$0xff]
      %v1117 = vld [vmem:[#allocation7 + $0x608] sm:$0xff]
      %v1118 = vld [vmem:[#allocation7 + $0x610] sm:$0xff]
      %v1119 = vld [vmem:[#allocation7 + $0x618] sm:$0xff]
      %v1120 = vld [vmem:[#allocation7 + $0x620] sm:$0xff]
      %v1121 = vld [vmem:[#allocation7 + $0x628] sm:$0xff]
      %v1122 = vld [vmem:[#allocation7 + $0x630] sm:$0xff]
      %v1123 = vld [vmem:[#allocation7 + $0x638] sm:$0xff]
      %v1124 = vld [vmem:[#allocation7 + $0x640] sm:$0xff]
      %v1125 = vld [vmem:[#allocation7 + $0x648] sm:$0xff]
      %v1126 = vld [vmem:[#allocation7 + $0x650] sm:$0xff]
      %v1127 = vld [vmem:[#allocation7 + $0x658] sm:$0xff]
      %v1128 = vld [vmem:[#allocation7 + $0x660] sm:$0xff]
      %v1129 = vld [vmem:[#allocation7 + $0x668] sm:$0xff]
      %v1130 = vld [vmem:[#allocation7 + $0x670] sm:$0xff]
      %v1131 = vld [vmem:[#allocation7 + $0x678] sm:$0xff]
      %v1132 = vld [vmem:[#allocation7 + $0x680] sm:$0xff]
      %v1133 = vld [vmem:[#allocation7 + $0x688] sm:$0xff]
      %v1134 = vld [vmem:[#allocation7 + $0x690] sm:$0xff]
      %v1135 = vld [vmem:[#allocation7 + $0x698] sm:$0xff]
      %v1136 = vld [vmem:[#allocation7 + $0x6a0] sm:$0xff]
      %v1137 = vld [vmem:[#allocation7 + $0x6a8] sm:$0xff]
      %v1138 = vld [vmem:[#allocation7 + $0x6b0] sm:$0xff]
      %v1139 = vld [vmem:[#allocation7 + $0x6b8] sm:$0xff]
      %v1140 = vld [vmem:[#allocation7 + $0x6c0] sm:$0xff]
      %v1141 = vld [vmem:[#allocation7 + $0x6c8] sm:$0xff]
      %v1142 = vld [vmem:[#allocation7 + $0x6d0] sm:$0xff]
      %v1143 = vld [vmem:[#allocation7 + $0x6d8] sm:$0xff]
      %v1144 = vld [vmem:[#allocation7 + $0x6e0] sm:$0xff]
      %v1145 = vld [vmem:[#allocation7 + $0x6e8] sm:$0xff]
      %v1146 = vld [vmem:[#allocation7 + $0x6f0] sm:$0xff]
      %v1147 = vld [vmem:[#allocation7 + $0x6f8] sm:$0xff]
      %v1148 = vld [vmem:[#allocation7 + $0x700] sm:$0xff]
      %v1149 = vld [vmem:[#allocation7 + $0x708] sm:$0xff]
      %v1150 = vld [vmem:[#allocation7 + $0x710] sm:$0xff]
      %v1151 = vld [vmem:[#allocation7 + $0x718] sm:$0xff]
      %v1152 = vld [vmem:[#allocation7 + $0x720] sm:$0xff]
      %v1153 = vld [vmem:[#allocation7 + $0x728] sm:$0xff]
      %v1154 = vld [vmem:[#allocation7 + $0x730] sm:$0xff]
      %v1155 = vld [vmem:[#allocation7 + $0x738] sm:$0xff]
      %v1156 = vld [vmem:[#allocation7 + $0x740] sm:$0xff]
      %v1157 = vld [vmem:[#allocation7 + $0x748] sm:$0xff]
      %v1158 = vld [vmem:[#allocation7 + $0x750] sm:$0xff]
      %v1159 = vld [vmem:[#allocation7 + $0x758] sm:$0xff]
      %v1160 = vld [vmem:[#allocation7 + $0x760] sm:$0xff]
      %v1161 = vld [vmem:[#allocation7 + $0x768] sm:$0xff]
      %v1162 = vld [vmem:[#allocation7 + $0x770] sm:$0xff]
      %v1163 = vld [vmem:[#allocation7 + $0x778] sm:$0xff]
      %v1164 = vld [vmem:[#allocation7 + $0x780] sm:$0xff]
      %v1165 = vld [vmem:[#allocation7 + $0x788] sm:$0xff]
      %v1166 = vld [vmem:[#allocation7 + $0x790] sm:$0xff]
      %v1167 = vld [vmem:[#allocation7 + $0x798] sm:$0xff]
      %v1168 = vld [vmem:[#allocation7 + $0x7a0] sm:$0xff]
      %v1169 = vld [vmem:[#allocation7 + $0x7a8] sm:$0xff]
      %v1170 = vld [vmem:[#allocation7 + $0x7b0] sm:$0xff]
      %v1171 = vld [vmem:[#allocation7 + $0x7b8] sm:$0xff]
      %v1172 = vld [vmem:[#allocation7 + $0x7c0] sm:$0xff]
      %v1173 = vld [vmem:[#allocation7 + $0x7c8] sm:$0xff]
      %v1174 = vld [vmem:[#allocation7 + $0x7d0] sm:$0xff]
      %v1175 = vld [vmem:[#allocation7 + $0x7d8] sm:$0xff]
      %v1176 = vld [vmem:[#allocation7 + $0x7e0] sm:$0xff]
      %v1177 = vld [vmem:[#allocation7 + $0x7e8] sm:$0xff]
      %v1178 = vld [vmem:[#allocation7 + $0x7f0] sm:$0xff]
      %v1179 = vld [vmem:[#allocation7 + $0x7f8] sm:$0xff]
      %v1180 = vld [vmem:[#allocation7 + $0x800] sm:$0xff]
      %v1181 = vld [vmem:[#allocation7 + $0x808] sm:$0xff]
      %v1182 = vld [vmem:[#allocation7 + $0x810] sm:$0xff]
      %v1183 = vld [vmem:[#allocation7 + $0x818] sm:$0xff]
      %v1184 = vld [vmem:[#allocation7 + $0x820] sm:$0xff]
      %v1185 = vld [vmem:[#allocation7 + $0x828] sm:$0xff]
      %v1186 = vld [vmem:[#allocation7 + $0x830] sm:$0xff]
      %v1187 = vld [vmem:[#allocation7 + $0x838] sm:$0xff]
      %v1188 = vld [vmem:[#allocation7 + $0x840] sm:$0xff]
      %v1189 = vld [vmem:[#allocation7 + $0x848] sm:$0xff]
      %v1190 = vld [vmem:[#allocation7 + $0x850] sm:$0xff]
      %v1191 = vld [vmem:[#allocation7 + $0x858] sm:$0xff]
      %v1192 = vld [vmem:[#allocation7 + $0x860] sm:$0xff]
      %v1193 = vld [vmem:[#allocation7 + $0x868] sm:$0xff]
      %v1194 = vld [vmem:[#allocation7 + $0x870] sm:$0xff]
      %v1195 = vld [vmem:[#allocation7 + $0x878] sm:$0xff]
      %v1196 = vld [vmem:[#allocation7 + $0x880] sm:$0xff]
      %v1197 = vld [vmem:[#allocation7 + $0x888] sm:$0xff]
      %v1198 = vld [vmem:[#allocation7 + $0x890] sm:$0xff]
      %v1199 = vld [vmem:[#allocation7 + $0x898] sm:$0xff]
      %v1200 = vld [vmem:[#allocation7 + $0x8a0] sm:$0xff]
      %v1201 = vld [vmem:[#allocation7 + $0x8a8] sm:$0xff]
      %v1202 = vld [vmem:[#allocation7 + $0x8b0] sm:$0xff]
      %v1203 = vld [vmem:[#allocation7 + $0x8b8] sm:$0xff]
      %v1204 = vld [vmem:[#allocation7 + $0x8c0] sm:$0xff]
      %v1205 = vld [vmem:[#allocation7 + $0x8c8] sm:$0xff]
      %v1206 = vld [vmem:[#allocation7 + $0x8d0] sm:$0xff]
      %v1207 = vld [vmem:[#allocation7 + $0x8d8] sm:$0xff]
      %v1208 = vld [vmem:[#allocation7 + $0x8e0] sm:$0xff]
      %v1209 = vld [vmem:[#allocation7 + $0x8e8] sm:$0xff]
      %v1210 = vld [vmem:[#allocation7 + $0x8f0] sm:$0xff]
      %v1211 = vld [vmem:[#allocation7 + $0x8f8] sm:$0xff]
      %v1212 = vld [vmem:[#allocation7 + $0x900] sm:$0xff]
      %v1213 = vld [vmem:[#allocation7 + $0x908] sm:$0xff]
      %v1214 = vld [vmem:[#allocation7 + $0x910] sm:$0xff]
      %v1215 = vld [vmem:[#allocation7 + $0x918] sm:$0xff]
      %v1216 = vld [vmem:[#allocation7 + $0x920] sm:$0xff]
      %v1217 = vld [vmem:[#allocation7 + $0x928] sm:$0xff]
      %v1218 = vld [vmem:[#allocation7 + $0x930] sm:$0xff]
      %v1219 = vld [vmem:[#allocation7 + $0x938] sm:$0xff]
      %v1220 = vld [vmem:[#allocation7 + $0x940] sm:$0xff]
      %v1221 = vld [vmem:[#allocation7 + $0x948] sm:$0xff]
      %v1222 = vld [vmem:[#allocation7 + $0x950] sm:$0xff]
      %v1223 = vld [vmem:[#allocation7 + $0x958] sm:$0xff]
      %v1224 = vld [vmem:[#allocation7 + $0x960] sm:$0xff]
      %v1225 = vld [vmem:[#allocation7 + $0x968] sm:$0xff]
      %v1226 = vld [vmem:[#allocation7 + $0x970] sm:$0xff]
      %v1227 = vld [vmem:[#allocation7 + $0x978] sm:$0xff]
      %v1228 = vld [vmem:[#allocation7 + $0x980] sm:$0xff]
      %v1229 = vld [vmem:[#allocation7 + $0x988] sm:$0xff]
      %v1230 = vld [vmem:[#allocation7 + $0x990] sm:$0xff]
      %v1231 = vld [vmem:[#allocation7 + $0x998] sm:$0xff]
      %v1232 = vld [vmem:[#allocation7 + $0x9a0] sm:$0xff]
      %v1233 = vld [vmem:[#allocation7 + $0x9a8] sm:$0xff]
      %v1234 = vld [vmem:[#allocation7 + $0x9b0] sm:$0xff]
      %v1235 = vld [vmem:[#allocation7 + $0x9b8] sm:$0xff]
      %v1236 = vld [vmem:[#allocation7 + $0x9c0] sm:$0xff]
      %v1237 = vld [vmem:[#allocation7 + $0x9c8] sm:$0xff]
      %v1238 = vld [vmem:[#allocation7 + $0x9d0] sm:$0xff]
      %v1239 = vld [vmem:[#allocation7 + $0x9d8] sm:$0xff]
      %v1240 = vld [vmem:[#allocation7 + $0x9e0] sm:$0xff]
      %v1241 = vld [vmem:[#allocation7 + $0x9e8] sm:$0xff]
      %v1242 = vld [vmem:[#allocation7 + $0x9f0] sm:$0xff]
      %v1243 = vld [vmem:[#allocation7 + $0x9f8] sm:$0xff]
      %v1244 = vld [vmem:[#allocation7 + $0xa00] sm:$0xff]
      %v1245 = vld [vmem:[#allocation7 + $0xa08] sm:$0xff]
      %v1246 = vld [vmem:[#allocation7 + $0xa10] sm:$0xff]
      %v1247 = vld [vmem:[#allocation7 + $0xa18] sm:$0xff]
      %v1248 = vld [vmem:[#allocation7 + $0xa20] sm:$0xff]
      %v1249 = vld [vmem:[#allocation7 + $0xa28] sm:$0xff]
      %v1250 = vld [vmem:[#allocation7 + $0xa30] sm:$0xff]
      %v1251 = vld [vmem:[#allocation7 + $0xa38] sm:$0xff]
      %v1252 = vld [vmem:[#allocation7 + $0xa40] sm:$0xff]
      %v1253 = vld [vmem:[#allocation7 + $0xa48] sm:$0xff]
      %v1254 = vld [vmem:[#allocation7 + $0xa50] sm:$0xff]
      %v1255 = vld [vmem:[#allocation7 + $0xa58] sm:$0xff]
      %v1256 = vld [vmem:[#allocation7 + $0xa60] sm:$0xff]
      %v1257 = vld [vmem:[#allocation7 + $0xa68] sm:$0xff]
      %v1258 = vld [vmem:[#allocation7 + $0xa70] sm:$0xff]
      %v1259 = vld [vmem:[#allocation7 + $0xa78] sm:$0xff]
      %v1260 = vld [vmem:[#allocation7 + $0xa80] sm:$0xff]
      %v1261 = vld [vmem:[#allocation7 + $0xa88] sm:$0xff]
      %v1262 = vld [vmem:[#allocation7 + $0xa90] sm:$0xff]
      %v1263 = vld [vmem:[#allocation7 + $0xa98] sm:$0xff]
      %v1264 = vld [vmem:[#allocation7 + $0xaa0] sm:$0xff]
      %v1265 = vld [vmem:[#allocation7 + $0xaa8] sm:$0xff]
      %v1266 = vld [vmem:[#allocation7 + $0xab0] sm:$0xff]
      %v1267 = vld [vmem:[#allocation7 + $0xab8] sm:$0xff]
      %v1268 = vld [vmem:[#allocation7 + $0xac0] sm:$0xff]
      %v1269 = vld [vmem:[#allocation7 + $0xac8] sm:$0xff]
      %v1270 = vld [vmem:[#allocation7 + $0xad0] sm:$0xff]
      %v1271 = vld [vmem:[#allocation7 + $0xad8] sm:$0xff]
      %v1272 = vld [vmem:[#allocation7 + $0xae0] sm:$0xff]
      %v1273 = vld [vmem:[#allocation7 + $0xae8] sm:$0xff]
      %v1274 = vld [vmem:[#allocation7 + $0xaf0] sm:$0xff]
      %v1275 = vld [vmem:[#allocation7 + $0xaf8] sm:$0xff]
      %v1276 = vld [vmem:[#allocation7 + $0xb00] sm:$0xff]
      %v1277 = vld [vmem:[#allocation7 + $0xb08] sm:$0xff]
      %v1278 = vld [vmem:[#allocation7 + $0xb10] sm:$0xff]
      %v1279 = vld [vmem:[#allocation7 + $0xb18] sm:$0xff]
      %v1280 = vld [vmem:[#allocation7 + $0xb20] sm:$0xff]
      %v1281 = vld [vmem:[#allocation7 + $0xb28] sm:$0xff]
      %v1282 = vld [vmem:[#allocation7 + $0xb30] sm:$0xff]
      %v1283 = vld [vmem:[#allocation7 + $0xb38] sm:$0xff]
      %v1284 = vld [vmem:[#allocation7 + $0xb40] sm:$0xff]
      %v1285 = vld [vmem:[#allocation7 + $0xb48] sm:$0xff]
      %v1286 = vld [vmem:[#allocation7 + $0xb50] sm:$0xff]
      %v1287 = vld [vmem:[#allocation7 + $0xb58] sm:$0xff]
      %v1288 = vld [vmem:[#allocation7 + $0xb60] sm:$0xff]
      %v1289 = vld [vmem:[#allocation7 + $0xb68] sm:$0xff]
      %v1290 = vld [vmem:[#allocation7 + $0xb70] sm:$0xff]
      %v1291 = vld [vmem:[#allocation7 + $0xb78] sm:$0xff]
      %v1292 = vld [vmem:[#allocation7 + $0xb80] sm:$0xff]
      %v1293 = vld [vmem:[#allocation7 + $0xb88] sm:$0xff]
      %v1294 = vld [vmem:[#allocation7 + $0xb90] sm:$0xff]
      %v1295 = vld [vmem:[#allocation7 + $0xb98] sm:$0xff]
      %v1296 = vld [vmem:[#allocation7 + $0xba0] sm:$0xff]
      %v1297 = vld [vmem:[#allocation7 + $0xba8] sm:$0xff]
      %v1298 = vld [vmem:[#allocation7 + $0xbb0] sm:$0xff]
      %v1299 = vld [vmem:[#allocation7 + $0xbb8] sm:$0xff]
      %v1300 = vld [vmem:[#allocation7 + $0xbc0] sm:$0xff]
      %v1301 = vld [vmem:[#allocation7 + $0xbc8] sm:$0xff]
      %v1302 = vld [vmem:[#allocation7 + $0xbd0] sm:$0xff]
      %v1303 = vld [vmem:[#allocation7 + $0xbd8] sm:$0xff]
      %v1304 = vld [vmem:[#allocation7 + $0xbe0] sm:$0xff]
      %v1305 = vld [vmem:[#allocation7 + $0xbe8] sm:$0xff]
      %v1306 = vld [vmem:[#allocation7 + $0xbf0] sm:$0xff]
      %v1307 = vld [vmem:[#allocation7 + $0xbf8] sm:$0xff]
      %v1308 = vld [vmem:[#allocation7 + $0xc00] sm:$0xff]
      %v1309 = vld [vmem:[#allocation7 + $0xc08] sm:$0xff]
      %v1310 = vld [vmem:[#allocation7 + $0xc10] sm:$0xff]
      %v1311 = vld [vmem:[#allocation7 + $0xc18] sm:$0xff]
      %v1312 = vld [vmem:[#allocation7 + $0xc20] sm:$0xff]
      %v1313 = vld [vmem:[#allocation7 + $0xc28] sm:$0xff]
      %v1314 = vld [vmem:[#allocation7 + $0xc30] sm:$0xff]
      %v1315 = vld [vmem:[#allocation7 + $0xc38] sm:$0xff]
      %v1316 = vld [vmem:[#allocation7 + $0xc40] sm:$0xff]
      %v1317 = vld [vmem:[#allocation7 + $0xc48] sm:$0xff]
      %v1318 = vld [vmem:[#allocation7 + $0xc50] sm:$0xff]
      %v1319 = vld [vmem:[#allocation7 + $0xc58] sm:$0xff]
      %v1320 = vld [vmem:[#allocation7 + $0xc60] sm:$0xff]
      %v1321 = vld [vmem:[#allocation7 + $0xc68] sm:$0xff]
      %v1322 = vld [vmem:[#allocation7 + $0xc70] sm:$0xff]
      %v1323 = vld [vmem:[#allocation7 + $0xc78] sm:$0xff]
      %v1324 = vld [vmem:[#allocation7 + $0xc80] sm:$0xff]
      %v1325 = vld [vmem:[#allocation7 + $0xc88] sm:$0xff]
      %v1326 = vld [vmem:[#allocation7 + $0xc90] sm:$0xff]
      %v1327 = vld [vmem:[#allocation7 + $0xc98] sm:$0xff]
      %v1328 = vld [vmem:[#allocation7 + $0xca0] sm:$0xff]
      %v1329 = vld [vmem:[#allocation7 + $0xca8] sm:$0xff]
      %v1330 = vld [vmem:[#allocation7 + $0xcb0] sm:$0xff]
      %v1331 = vld [vmem:[#allocation7 + $0xcb8] sm:$0xff]
      %v1332 = vld [vmem:[#allocation7 + $0xcc0] sm:$0xff]
      %v1333 = vld [vmem:[#allocation7 + $0xcc8] sm:$0xff]
      %v1334 = vld [vmem:[#allocation7 + $0xcd0] sm:$0xff]
      %v1335 = vld [vmem:[#allocation7 + $0xcd8] sm:$0xff]
      %v1336 = vld [vmem:[#allocation7 + $0xce0] sm:$0xff]
      %v1337 = vld [vmem:[#allocation7 + $0xce8] sm:$0xff]
      %v1338 = vld [vmem:[#allocation7 + $0xcf0] sm:$0xff]
      %v1339 = vld [vmem:[#allocation7 + $0xcf8] sm:$0xff]
      %v1340 = vld [vmem:[#allocation7 + $0xd00] sm:$0xff]
      %v1341 = vld [vmem:[#allocation7 + $0xd08] sm:$0xff]
      %v1342 = vld [vmem:[#allocation7 + $0xd10] sm:$0xff]
      %v1343 = vld [vmem:[#allocation7 + $0xd18] sm:$0xff]
      %v1344 = vld [vmem:[#allocation7 + $0xd20] sm:$0xff]
      %v1345 = vld [vmem:[#allocation7 + $0xd28] sm:$0xff]
      %v1346 = vld [vmem:[#allocation7 + $0xd30] sm:$0xff]
      %v1347 = vld [vmem:[#allocation7 + $0xd38] sm:$0xff]
      %v1348 = vld [vmem:[#allocation7 + $0xd40] sm:$0xff]
      %v1349 = vld [vmem:[#allocation7 + $0xd48] sm:$0xff]
      %v1350 = vld [vmem:[#allocation7 + $0xd50] sm:$0xff]
      %v1351 = vld [vmem:[#allocation7 + $0xd58] sm:$0xff]
      %v1352 = vld [vmem:[#allocation7 + $0xd60] sm:$0xff]
      %v1353 = vld [vmem:[#allocation7 + $0xd68] sm:$0xff]
      %v1354 = vld [vmem:[#allocation7 + $0xd70] sm:$0xff]
      %v1355 = vld [vmem:[#allocation7 + $0xd78] sm:$0xff]
      %v1356 = vld [vmem:[#allocation7 + $0xd80] sm:$0xff]
      %v1357 = vld [vmem:[#allocation7 + $0xd88] sm:$0xff]
      %v1358 = vld [vmem:[#allocation7 + $0xd90] sm:$0xff]
      %v1359 = vld [vmem:[#allocation7 + $0xd98] sm:$0xff]
      %v1360 = vld [vmem:[#allocation7 + $0xda0] sm:$0xff]
      %v1361 = vld [vmem:[#allocation7 + $0xda8] sm:$0xff]
      %v1362 = vld [vmem:[#allocation7 + $0xdb0] sm:$0xff]
      %v1363 = vld [vmem:[#allocation7 + $0xdb8] sm:$0xff]
      %v1364 = vld [vmem:[#allocation7 + $0xdc0] sm:$0xff]
      %v1365 = vld [vmem:[#allocation7 + $0xdc8] sm:$0xff]
      %v1366 = vld [vmem:[#allocation7 + $0xdd0] sm:$0xff]
      %v1367 = vld [vmem:[#allocation7 + $0xdd8] sm:$0xff]
      %v1368 = vld [vmem:[#allocation7 + $0xde0] sm:$0xff]
      %v1369 = vld [vmem:[#allocation7 + $0xde8] sm:$0xff]
      %v1370 = vld [vmem:[#allocation7 + $0xdf0] sm:$0xff]
      %v1371 = vld [vmem:[#allocation7 + $0xdf8] sm:$0xff]
      %v1372 = vld [vmem:[#allocation7 + $0xe00] sm:$0xff]
      %v1373 = vld [vmem:[#allocation7 + $0xe08] sm:$0xff]
      %v1374 = vld [vmem:[#allocation7 + $0xe10] sm:$0xff]
      %v1375 = vld [vmem:[#allocation7 + $0xe18] sm:$0xff]
      %v1376 = vld [vmem:[#allocation7 + $0xe20] sm:$0xff]
      %v1377 = vld [vmem:[#allocation7 + $0xe28] sm:$0xff]
      %v1378 = vld [vmem:[#allocation7 + $0xe30] sm:$0xff]
      %v1379 = vld [vmem:[#allocation7 + $0xe38] sm:$0xff]
      %v1380 = vld [vmem:[#allocation7 + $0xe40] sm:$0xff]
      %v1381 = vld [vmem:[#allocation7 + $0xe48] sm:$0xff]
      %v1382 = vld [vmem:[#allocation7 + $0xe50] sm:$0xff]
      %v1383 = vld [vmem:[#allocation7 + $0xe58] sm:$0xff]
      %v1384 = vld [vmem:[#allocation7 + $0xe60] sm:$0xff]
      %v1385 = vld [vmem:[#allocation7 + $0xe68] sm:$0xff]
      %v1386 = vld [vmem:[#allocation7 + $0xe70] sm:$0xff]
      %v1387 = vld [vmem:[#allocation7 + $0xe78] sm:$0xff]
      %v1388 = vld [vmem:[#allocation7 + $0xe80] sm:$0xff]
      %v1389 = vld [vmem:[#allocation7 + $0xe88] sm:$0xff]
      %v1390 = vld [vmem:[#allocation7 + $0xe90] sm:$0xff]
      %v1391 = vld [vmem:[#allocation7 + $0xe98] sm:$0xff]
      %v1392 = vld [vmem:[#allocation7 + $0xea0] sm:$0xff]
      %v1393 = vld [vmem:[#allocation7 + $0xea8] sm:$0xff]
      %v1394 = vld [vmem:[#allocation7 + $0xeb0] sm:$0xff]
      %v1395 = vld [vmem:[#allocation7 + $0xeb8] sm:$0xff]
      %v1396 = vld [vmem:[#allocation7 + $0xec0] sm:$0xff]
      %v1397 = vld [vmem:[#allocation7 + $0xec8] sm:$0xff]
      %v1398 = vld [vmem:[#allocation7 + $0xed0] sm:$0xff]
      %v1399 = vld [vmem:[#allocation7 + $0xed8] sm:$0xff]
      %v1400 = vld [vmem:[#allocation7 + $0xee0] sm:$0xff]
      %v1401 = vld [vmem:[#allocation7 + $0xee8] sm:$0xff]
      %v1402 = vld [vmem:[#allocation7 + $0xef0] sm:$0xff]
      %v1403 = vld [vmem:[#allocation7 + $0xef8] sm:$0xff]
      %v1404 = vld [vmem:[#allocation7 + $0xf00] sm:$0xff]
      %v1405 = vld [vmem:[#allocation7 + $0xf08] sm:$0xff]
      %v1406 = vld [vmem:[#allocation7 + $0xf10] sm:$0xff]
      %v1407 = vld [vmem:[#allocation7 + $0xf18] sm:$0xff]
      %v1408 = vld [vmem:[#allocation7 + $0xf20] sm:$0xff]
      %v1409 = vld [vmem:[#allocation7 + $0xf28] sm:$0xff]
      %v1410 = vld [vmem:[#allocation7 + $0xf30] sm:$0xff]
      %v1411 = vld [vmem:[#allocation7 + $0xf38] sm:$0xff]
      %v1412 = vld [vmem:[#allocation7 + $0xf40] sm:$0xff]
      %v1413 = vld [vmem:[#allocation7 + $0xf48] sm:$0xff]
      %v1414 = vld [vmem:[#allocation7 + $0xf50] sm:$0xff]
      %v1415 = vld [vmem:[#allocation7 + $0xf58] sm:$0xff]
      %v1416 = vld [vmem:[#allocation7 + $0xf60] sm:$0xff]
      %v1417 = vld [vmem:[#allocation7 + $0xf68] sm:$0xff]
      %v1418 = vld [vmem:[#allocation7 + $0xf70] sm:$0xff]
      %v1419 = vld [vmem:[#allocation7 + $0xf78] sm:$0xff]
      %v1420 = vld [vmem:[#allocation7 + $0xf80] sm:$0xff]
      %v1421 = vld [vmem:[#allocation7 + $0xf88] sm:$0xff]
      %v1422 = vld [vmem:[#allocation7 + $0xf90] sm:$0xff]
      %v1423 = vld [vmem:[#allocation7 + $0xf98] sm:$0xff]
      %v1424 = vld [vmem:[#allocation7 + $0xfa0] sm:$0xff]
      %v1425 = vld [vmem:[#allocation7 + $0xfa8] sm:$0xff]
      %v1426 = vld [vmem:[#allocation7 + $0xfb0] sm:$0xff]
      %v1427 = vld [vmem:[#allocation7 + $0xfb8] sm:$0xff]
      %v1428 = vld [vmem:[#allocation7 + $0xfc0] sm:$0xff]
      %v1429 = vld [vmem:[#allocation7 + $0xfc8] sm:$0xff]
      %v1430 = vld [vmem:[#allocation7 + $0xfd0] sm:$0xff]
      %v1431 = vld [vmem:[#allocation7 + $0xfd8] sm:$0xff]
      %v1432 = vld [vmem:[#allocation7 + $0xfe0] sm:$0xff]
      %v1433 = vld [vmem:[#allocation7 + $0xfe8] sm:$0xff]
      %v1434 = vld [vmem:[#allocation7 + $0xff0] sm:$0xff]
      %v1435 = vld [vmem:[#allocation7 + $0xff8] sm:$0xff]
      %v1436 = vld [vmem:[#allocation9] sm:$0xf]
      %v1438 = vlaneseq
      %v1439 = vshrl.u32 %v1438, 7
      %v1440 = vsub.s32 0, %v1439
      %v1441 = vrot.slane %v1436, %v1440
      %v1442 = vlaneseq
      %v1443 = vshrl.u32 %v1442, 7
      %v1444 = vsub.s32 1, %v1443
      %v1445 = vrot.slane %v1436, %v1444
      %v1446 = vlaneseq
      %v1447 = vshrl.u32 %v1446, 7
      %v1448 = vsub.s32 2, %v1447
      %v1449 = vrot.slane %v1436, %v1448
      %v1450 = vlaneseq
      %v1451 = vshrl.u32 %v1450, 7
      %v1452 = vsub.s32 3, %v1451
      %v1453 = vrot.slane %v1436, %v1452
      %1458 = vmatprep.subr.mxu0 %v925
      %1459 = vmatpush1.msra.mxu0 %v924
      %1460 = vmatprep.subr.mxu0 %v929
      %1461 = vmatpush1.msra.mxu0 %v928
      %1462 = vmatprep.subr.mxu0 %v933
      %1463 = vmatpush1.msra.mxu0 %v932
      %1464 = vmatprep.subr.mxu0 %v937
      %1465 = vmatpush1.msra.mxu0 %v936
      %1466 = vmatprep.subr.mxu0 %v941
      %1467 = vmatpush1.msra.mxu0 %v940
      %1468 = vmatprep.subr.mxu0 %v945
      %1469 = vmatpush1.msra.mxu0 %v944
      %1470 = vmatprep.subr.mxu0 %v949
      %1471 = vmatpush1.msra.mxu0 %v948
      %1472 = vmatprep.subr.mxu0 %v953
      %1473 = vmatpush1.msra.mxu0 %v952
      %1474 = vmatprep.subr.mxu0 %v957
      %1475 = vmatpush1.msra.mxu0 %v956
      %1476 = vmatprep.subr.mxu0 %v961
      %1477 = vmatpush1.msra.mxu0 %v960
      %1478 = vmatprep.subr.mxu0 %v965
      %1479 = vmatpush1.msra.mxu0 %v964
      %1480 = vmatprep.subr.mxu0 %v969
      %1481 = vmatpush1.msra.mxu0 %v968
      %1482 = vmatprep.subr.mxu0 %v973
      %1483 = vmatpush1.msra.mxu0 %v972
      %1484 = vmatprep.subr.mxu0 %v977
      %1485 = vmatpush1.msra.mxu0 %v976
      %1486 = vmatprep.subr.mxu0 %v981
      %1487 = vmatpush1.msra.mxu0 %v980
      %1488 = vmatprep.subr.mxu0 %v985
      %1489 = vmatpush1.msra.mxu0 %v984
      %1490 = vmatprep.subr.mxu0 %v989
      %1491 = vmatpush1.msra.mxu0 %v988
      %1492 = vmatprep.subr.mxu0 %v993
      %1493 = vmatpush1.msra.mxu0 %v992
      %1494 = vmatprep.subr.mxu0 %v997
      %1495 = vmatpush1.msra.mxu0 %v996
      %1496 = vmatprep.subr.mxu0 %v1001
      %1497 = vmatpush1.msra.mxu0 %v1000
      %1498 = vmatprep.subr.mxu0 %v1005
      %1499 = vmatpush1.msra.mxu0 %v1004
      %1500 = vmatprep.subr.mxu0 %v1009
      %1501 = vmatpush1.msra.mxu0 %v1008
      %1502 = vmatprep.subr.mxu0 %v1013
      %1503 = vmatpush1.msra.mxu0 %v1012
      %1504 = vmatprep.subr.mxu0 %v1017
      %1505 = vmatpush1.msra.mxu0 %v1016
      %1506 = vmatprep.subr.mxu0 %v1021
      %1507 = vmatpush1.msra.mxu0 %v1020
      %1508 = vmatprep.subr.mxu0 %v1025
      %1509 = vmatpush1.msra.mxu0 %v1024
      %1510 = vmatprep.subr.mxu0 %v1029
      %1511 = vmatpush1.msra.mxu0 %v1028
      %1512 = vmatprep.subr.mxu0 %v1033
      %1513 = vmatpush1.msra.mxu0 %v1032
      %1514 = vmatprep.subr.mxu0 %v1037
      %1515 = vmatpush1.msra.mxu0 %v1036
      %1516 = vmatprep.subr.mxu0 %v1041
      %1517 = vmatpush1.msra.mxu0 %v1040
      %1518 = vmatprep.subr.mxu0 %v1045
      %1519 = vmatpush1.msra.mxu0 %v1044
      %1520 = vmatprep.subr.mxu0 %v1049
      %1521 = vmatpush1.msra.mxu0 %v1048
      %1522 = vmatprep.mubr.f32.mxu0 %v917
      %1523 = vmatmul.mubr.f32.gmra.mrb[0].mxu0 %v916
      %v1524 = vpop.f32.mrb[0].mxu0
      %v1525 = vadd.f32 %v1441, %v1524
      %v1526 = vpop.f32.mrb[0].mxu0
      %v1527 = vadd.f32 %v1445, %v1526
      %1528 = vdwg.mxu0
      %1529 = vmatprep.subr.mxu0 %v1053
      %1530 = vmatpush1.msra.mxu0 %v1052
      %1531 = vmatprep.subr.mxu0 %v1057
      %1532 = vmatpush1.msra.mxu0 %v1056
      %1533 = vmatprep.subr.mxu0 %v1061
      %1534 = vmatpush1.msra.mxu0 %v1060
      %1535 = vmatprep.subr.mxu0 %v1065
      %1536 = vmatpush1.msra.mxu0 %v1064
      %1537 = vmatprep.subr.mxu0 %v1069
      %1538 = vmatpush1.msra.mxu0 %v1068
      %1539 = vmatprep.subr.mxu0 %v1073
      %1540 = vmatpush1.msra.mxu0 %v1072
      %1541 = vmatprep.subr.mxu0 %v1077
      %1542 = vmatpush1.msra.mxu0 %v1076
      %1543 = vmatprep.subr.mxu0 %v1081
      %1544 = vmatpush1.msra.mxu0 %v1080
      %1545 = vmatprep.subr.mxu0 %v1085
      %1546 = vmatpush1.msra.mxu0 %v1084
      %1547 = vmatprep.subr.mxu0 %v1089
      %1548 = vmatpush1.msra.mxu0 %v1088
      %1549 = vmatprep.subr.mxu0 %v1093
      %1550 = vmatpush1.msra.mxu0 %v1092
      %1551 = vmatprep.subr.mxu0 %v1097
      %1552 = vmatpush1.msra.mxu0 %v1096
      %1553 = vmatprep.subr.mxu0 %v1101
      %1554 = vmatpush1.msra.mxu0 %v1100
      %1555 = vmatprep.subr.mxu0 %v1105
      %1556 = vmatpush1.msra.mxu0 %v1104
      %1557 = vmatprep.subr.mxu0 %v1109
      %1558 = vmatpush1.msra.mxu0 %v1108
      %1559 = vmatprep.subr.mxu0 %v1113
      %1560 = vmatpush1.msra.mxu0 %v1112
      %1561 = vmatprep.subr.mxu0 %v1117
      %1562 = vmatpush1.msra.mxu0 %v1116
      %1563 = vmatprep.subr.mxu0 %v1121
      %1564 = vmatpush1.msra.mxu0 %v1120
      %1565 = vmatprep.subr.mxu0 %v1125
      %1566 = vmatpush1.msra.mxu0 %v1124
      %1567 = vmatprep.subr.mxu0 %v1129
      %1568 = vmatpush1.msra.mxu0 %v1128
      %1569 = vmatprep.subr.mxu0 %v1133
      %1570 = vmatpush1.msra.mxu0 %v1132
      %1571 = vmatprep.subr.mxu0 %v1137
      %1572 = vmatpush1.msra.mxu0 %v1136
      %1573 = vmatprep.subr.mxu0 %v1141
      %1574 = vmatpush1.msra.mxu0 %v1140
      %1575 = vmatprep.subr.mxu0 %v1145
      %1576 = vmatpush1.msra.mxu0 %v1144
      %1577 = vmatprep.subr.mxu0 %v1149
      %1578 = vmatpush1.msra.mxu0 %v1148
      %1579 = vmatprep.subr.mxu0 %v1153
      %1580 = vmatpush1.msra.mxu0 %v1152
      %1581 = vmatprep.subr.mxu0 %v1157
      %1582 = vmatpush1.msra.mxu0 %v1156
      %1583 = vmatprep.subr.mxu0 %v1161
      %1584 = vmatpush1.msra.mxu0 %v1160
      %1585 = vmatprep.subr.mxu0 %v1165
      %1586 = vmatpush1.msra.mxu0 %v1164
      %1587 = vmatprep.subr.mxu0 %v1169
      %1588 = vmatpush1.msra.mxu0 %v1168
      %1589 = vmatprep.subr.mxu0 %v1173
      %1590 = vmatpush1.msra.mxu0 %v1172
      %1591 = vmatprep.subr.mxu0 %v1177
      %1592 = vmatpush1.msra.mxu0 %v1176
      %1593 = vmatprep.mubr.f32.mxu0 %v919
      %1594 = vmatmul.mubr.f32.gmra.mrb[0].mxu0 %v918
      %v1595 = vpop.f32.mrb[0].mxu0
      %v1596 = vadd.f32 %v1525, %v1595
      %v1597 = vpop.f32.mrb[0].mxu0
      %v1598 = vadd.f32 %v1527, %v1597
      %1599 = vdwg.mxu0
      %1600 = vmatprep.subr.mxu0 %v1181
      %1601 = vmatpush1.msra.mxu0 %v1180
      %1602 = vmatprep.subr.mxu0 %v1185
      %1603 = vmatpush1.msra.mxu0 %v1184
      %1604 = vmatprep.subr.mxu0 %v1189
      %1605 = vmatpush1.msra.mxu0 %v1188
      %1606 = vmatprep.subr.mxu0 %v1193
      %1607 = vmatpush1.msra.mxu0 %v1192
      %1608 = vmatprep.subr.mxu0 %v1197
      %1609 = vmatpush1.msra.mxu0 %v1196
      %1610 = vmatprep.subr.mxu0 %v1201
      %1611 = vmatpush1.msra.mxu0 %v1200
      %1612 = vmatprep.subr.mxu0 %v1205
      %1613 = vmatpush1.msra.mxu0 %v1204
      %1614 = vmatprep.subr.mxu0 %v1209
      %1615 = vmatpush1.msra.mxu0 %v1208
      %1616 = vmatprep.subr.mxu0 %v1213
      %1617 = vmatpush1.msra.mxu0 %v1212
      %1618 = vmatprep.subr.mxu0 %v1217
      %1619 = vmatpush1.msra.mxu0 %v1216
      %1620 = vmatprep.subr.mxu0 %v1221
      %1621 = vmatpush1.msra.mxu0 %v1220
      %1622 = vmatprep.subr.mxu0 %v1225
      %1623 = vmatpush1.msra.mxu0 %v1224
      %1624 = vmatprep.subr.mxu0 %v1229
      %1625 = vmatpush1.msra.mxu0 %v1228
      %1626 = vmatprep.subr.mxu0 %v1233
      %1627 = vmatpush1.msra.mxu0 %v1232
      %1628 = vmatprep.subr.mxu0 %v1237
      %1629 = vmatpush1.msra.mxu0 %v1236
      %1630 = vmatprep.subr.mxu0 %v1241
      %1631 = vmatpush1.msra.mxu0 %v1240
      %1632 = vmatprep.subr.mxu0 %v1245
      %1633 = vmatpush1.msra.mxu0 %v1244
      %1634 = vmatprep.subr.mxu0 %v1249
      %1635 = vmatpush1.msra.mxu0 %v1248
      %1636 = vmatprep.subr.mxu0 %v1253
      %1637 = vmatpush1.msra.mxu0 %v1252
      %1638 = vmatprep.subr.mxu0 %v1257
      %1639 = vmatpush1.msra.mxu0 %v1256
      %1640 = vmatprep.subr.mxu0 %v1261
      %1641 = vmatpush1.msra.mxu0 %v1260
      %1642 = vmatprep.subr.mxu0 %v1265
      %1643 = vmatpush1.msra.mxu0 %v1264
      %1644 = vmatprep.subr.mxu0 %v1269
      %1645 = vmatpush1.msra.mxu0 %v1268
      %1646 = vmatprep.subr.mxu0 %v1273
      %1647 = vmatpush1.msra.mxu0 %v1272
      %1648 = vmatprep.subr.mxu0 %v1277
      %1649 = vmatpush1.msra.mxu0 %v1276
      %1650 = vmatprep.subr.mxu0 %v1281
      %1651 = vmatpush1.msra.mxu0 %v1280
      %1652 = vmatprep.subr.mxu0 %v1285
      %1653 = vmatpush1.msra.mxu0 %v1284
      %1654 = vmatprep.subr.mxu0 %v1289
      %1655 = vmatpush1.msra.mxu0 %v1288
      %1656 = vmatprep.subr.mxu0 %v1293
      %1657 = vmatpush1.msra.mxu0 %v1292
      %1658 = vmatprep.subr.mxu0 %v1297
      %1659 = vmatpush1.msra.mxu0 %v1296
      %1660 = vmatprep.subr.mxu0 %v1301
      %1661 = vmatpush1.msra.mxu0 %v1300
      %1662 = vmatprep.subr.mxu0 %v1305
      %1663 = vmatpush1.msra.mxu0 %v1304
      %1664 = vmatprep.mubr.f32.mxu0 %v921
      %1665 = vmatmul.mubr.f32.gmra.mrb[0].mxu0 %v920
      %v1666 = vpop.f32.mrb[0].mxu0
      %v1667 = vadd.f32 %v1596, %v1666
      %v1668 = vpop.f32.mrb[0].mxu0
      %v1669 = vadd.f32 %v1598, %v1668
      %1670 = vdwg.mxu0
      %1671 = vmatprep.subr.mxu0 %v1309
      %1672 = vmatpush1.msra.mxu0 %v1308
      %1673 = vmatprep.subr.mxu0 %v1313
      %1674 = vmatpush1.msra.mxu0 %v1312
      %1675 = vmatprep.subr.mxu0 %v1317
      %1676 = vmatpush1.msra.mxu0 %v1316
      %1677 = vmatprep.subr.mxu0 %v1321
      %1678 = vmatpush1.msra.mxu0 %v1320
      %1679 = vmatprep.subr.mxu0 %v1325
      %1680 = vmatpush1.msra.mxu0 %v1324
      %1681 = vmatprep.subr.mxu0 %v1329
      %1682 = vmatpush1.msra.mxu0 %v1328
      %1683 = vmatprep.subr.mxu0 %v1333
      %1684 = vmatpush1.msra.mxu0 %v1332
      %1685 = vmatprep.subr.mxu0 %v1337
      %1686 = vmatpush1.msra.mxu0 %v1336
      %1687 = vmatprep.subr.mxu0 %v1341
      %1688 = vmatpush1.msra.mxu0 %v1340
      %1689 = vmatprep.subr.mxu0 %v1345
      %1690 = vmatpush1.msra.mxu0 %v1344
      %1691 = vmatprep.subr.mxu0 %v1349
      %1692 = vmatpush1.msra.mxu0 %v1348
      %1693 = vmatprep.subr.mxu0 %v1353
      %1694 = vmatpush1.msra.mxu0 %v1352
      %1695 = vmatprep.subr.mxu0 %v1357
      %1696 = vmatpush1.msra.mxu0 %v1356
      %1697 = vmatprep.subr.mxu0 %v1361
      %1698 = vmatpush1.msra.mxu0 %v1360
      %1699 = vmatprep.subr.mxu0 %v1365
      %1700 = vmatpush1.msra.mxu0 %v1364
      %1701 = vmatprep.subr.mxu0 %v1369
      %1702 = vmatpush1.msra.mxu0 %v1368
      %1703 = vmatprep.subr.mxu0 %v1373
      %1704 = vmatpush1.msra.mxu0 %v1372
      %1705 = vmatprep.subr.mxu0 %v1377
      %1706 = vmatpush1.msra.mxu0 %v1376
      %1707 = vmatprep.subr.mxu0 %v1381
      %1708 = vmatpush1.msra.mxu0 %v1380
      %1709 = vmatprep.subr.mxu0 %v1385
      %1710 = vmatpush1.msra.mxu0 %v1384
      %1711 = vmatprep.subr.mxu0 %v1389
      %1712 = vmatpush1.msra.mxu0 %v1388
      %1713 = vmatprep.subr.mxu0 %v1393
      %1714 = vmatpush1.msra.mxu0 %v1392
      %1715 = vmatprep.subr.mxu0 %v1397
      %1716 = vmatpush1.msra.mxu0 %v1396
      %1717 = vmatprep.subr.mxu0 %v1401
      %1718 = vmatpush1.msra.mxu0 %v1400
      %1719 = vmatprep.subr.mxu0 %v1405
      %1720 = vmatpush1.msra.mxu0 %v1404
      %1721 = vmatprep.subr.mxu0 %v1409
      %1722 = vmatpush1.msra.mxu0 %v1408
      %1723 = vmatprep.subr.mxu0 %v1413
      %1724 = vmatpush1.msra.mxu0 %v1412
      %1725 = vmatprep.subr.mxu0 %v1417
      %1726 = vmatpush1.msra.mxu0 %v1416
      %1727 = vmatprep.subr.mxu0 %v1421
      %1728 = vmatpush1.msra.mxu0 %v1420
      %1729 = vmatprep.subr.mxu0 %v1425
      %1730 = vmatpush1.msra.mxu0 %v1424
      %1731 = vmatprep.subr.mxu0 %v1429
      %1732 = vmatpush1.msra.mxu0 %v1428
      %1733 = vmatprep.subr.mxu0 %v1433
      %1734 = vmatpush1.msra.mxu0 %v1432
      %1735 = vmatprep.mubr.f32.mxu0 %v923
      %1736 = vmatmul.mubr.f32.gmra.mrb[0].mxu0 %v922
      %v1737 = vpop.f32.mrb[0].mxu0
      %v1738 = vadd.f32 %v1667, %v1737
      %v1739 = vpop.f32.mrb[0].mxu0
      %v1740 = vadd.f32 %v1669, %v1739
      %1741 = vdwg.mxu0
      %1742 = vmatprep.subr.mxu0 %v927
      %1743 = vmatpush1.msra.mxu0 %v926
      %1744 = vmatprep.subr.mxu0 %v931
      %1745 = vmatpush1.msra.mxu0 %v930
      %1746 = vmatprep.subr.mxu0 %v935
      %1747 = vmatpush1.msra.mxu0 %v934
      %1748 = vmatprep.subr.mxu0 %v939
      %1749 = vmatpush1.msra.mxu0 %v938
      %1750 = vmatprep.subr.mxu0 %v943
      %1751 = vmatpush1.msra.mxu0 %v942
      %1752 = vmatprep.subr.mxu0 %v947
      %1753 = vmatpush1.msra.mxu0 %v946
      %1754 = vmatprep.subr.mxu0 %v951
      %1755 = vmatpush1.msra.mxu0 %v950
      %1756 = vmatprep.subr.mxu0 %v955
      %1757 = vmatpush1.msra.mxu0 %v954
      %1758 = vmatprep.subr.mxu0 %v959
      %1759 = vmatpush1.msra.mxu0 %v958
      %1760 = vmatprep.subr.mxu0 %v963
      %1761 = vmatpush1.msra.mxu0 %v962
      %1762 = vmatprep.subr.mxu0 %v967
      %1763 = vmatpush1.msra.mxu0 %v966
      %1764 = vmatprep.subr.mxu0 %v971
      %1765 = vmatpush1.msra.mxu0 %v970
      %1766 = vmatprep.subr.mxu0 %v975
      %1767 = vmatpush1.msra.mxu0 %v974
      %1768 = vmatprep.subr.mxu0 %v979
      %1769 = vmatpush1.msra.mxu0 %v978
      %1770 = vmatprep.subr.mxu0 %v983
      %1771 = vmatpush1.msra.mxu0 %v982
      %1772 = vmatprep.subr.mxu0 %v987
      %1773 = vmatpush1.msra.mxu0 %v986
      %1774 = vmatprep.subr.mxu0 %v991
      %1775 = vmatpush1.msra.mxu0 %v990
      %1776 = vmatprep.subr.mxu0 %v995
      %1777 = vmatpush1.msra.mxu0 %v994
      %1778 = vmatprep.subr.mxu0 %v999
      %1779 = vmatpush1.msra.mxu0 %v998
      %1780 = vmatprep.subr.mxu0 %v1003
      %1781 = vmatpush1.msra.mxu0 %v1002
      %1782 = vmatprep.subr.mxu0 %v1007
      %1783 = vmatpush1.msra.mxu0 %v1006
      %1784 = vmatprep.subr.mxu0 %v1011
      %1785 = vmatpush1.msra.mxu0 %v1010
      %1786 = vmatprep.subr.mxu0 %v1015
      %1787 = vmatpush1.msra.mxu0 %v1014
      %1788 = vmatprep.subr.mxu0 %v1019
      %1789 = vmatpush1.msra.mxu0 %v1018
      %1790 = vmatprep.subr.mxu0 %v1023
      %1791 = vmatpush1.msra.mxu0 %v1022
      %1792 = vmatprep.subr.mxu0 %v1027
      %1793 = vmatpush1.msra.mxu0 %v1026
      %1794 = vmatprep.subr.mxu0 %v1031
      %1795 = vmatpush1.msra.mxu0 %v1030
      %1796 = vmatprep.subr.mxu0 %v1035
      %1797 = vmatpush1.msra.mxu0 %v1034
      %1798 = vmatprep.subr.mxu0 %v1039
      %1799 = vmatpush1.msra.mxu0 %v1038
      %1800 = vmatprep.subr.mxu0 %v1043
      %1801 = vmatpush1.msra.mxu0 %v1042
      %1802 = vmatprep.subr.mxu0 %v1047
      %1803 = vmatpush1.msra.mxu0 %v1046
      %1804 = vmatprep.subr.mxu0 %v1051
      %1805 = vmatpush1.msra.mxu0 %v1050
      %1806 = vmatprep.mubr.f32.mxu0 %v917
      %1807 = vmatmul.mubr.f32.gmra.mrb[0].mxu0 %v916
      %v1808 = vpop.f32.mrb[0].mxu0
      %v1809 = vadd.f32 %v1449, %v1808
      %v1810 = vpop.f32.mrb[0].mxu0
      %v1811 = vadd.f32 %v1453, %v1810
      %1812 = vdwg.mxu0
      %1813 = vmatprep.subr.mxu0 %v1055
      %1814 = vmatpush1.msra.mxu0 %v1054
      %1815 = vmatprep.subr.mxu0 %v1059
      %1816 = vmatpush1.msra.mxu0 %v1058
      %1817 = vmatprep.subr.mxu0 %v1063
      %1818 = vmatpush1.msra.mxu0 %v1062
      %1819 = vmatprep.subr.mxu0 %v1067
      %1820 = vmatpush1.msra.mxu0 %v1066
      %1821 = vmatprep.subr.mxu0 %v1071
      %1822 = vmatpush1.msra.mxu0 %v1070
      %1823 = vmatprep.subr.mxu0 %v1075
      %1824 = vmatpush1.msra.mxu0 %v1074
      %1825 = vmatprep.subr.mxu0 %v1079
      %1826 = vmatpush1.msra.mxu0 %v1078
      %1827 = vmatprep.subr.mxu0 %v1083
      %1828 = vmatpush1.msra.mxu0 %v1082
      %1829 = vmatprep.subr.mxu0 %v1087
      %1830 = vmatpush1.msra.mxu0 %v1086
      %1831 = vmatprep.subr.mxu0 %v1091
      %1832 = vmatpush1.msra.mxu0 %v1090
      %1833 = vmatprep.subr.mxu0 %v1095
      %1834 = vmatpush1.msra.mxu0 %v1094
      %1835 = vmatprep.subr.mxu0 %v1099
      %1836 = vmatpush1.msra.mxu0 %v1098
      %1837 = vmatprep.subr.mxu0 %v1103
      %1838 = vmatpush1.msra.mxu0 %v1102
      %1839 = vmatprep.subr.mxu0 %v1107
      %1840 = vmatpush1.msra.mxu0 %v1106
      %1841 = vmatprep.subr.mxu0 %v1111
      %1842 = vmatpush1.msra.mxu0 %v1110
      %1843 = vmatprep.subr.mxu0 %v1115
      %1844 = vmatpush1.msra.mxu0 %v1114
      %1845 = vmatprep.subr.mxu0 %v1119
      %1846 = vmatpush1.msra.mxu0 %v1118
      %1847 = vmatprep.subr.mxu0 %v1123
      %1848 = vmatpush1.msra.mxu0 %v1122
      %1849 = vmatprep.subr.mxu0 %v1127
      %1850 = vmatpush1.msra.mxu0 %v1126
      %1851 = vmatprep.subr.mxu0 %v1131
      %1852 = vmatpush1.msra.mxu0 %v1130
      %1853 = vmatprep.subr.mxu0 %v1135
      %1854 = vmatpush1.msra.mxu0 %v1134
      %1855 = vmatprep.subr.mxu0 %v1139
      %1856 = vmatpush1.msra.mxu0 %v1138
      %1857 = vmatprep.subr.mxu0 %v1143
      %1858 = vmatpush1.msra.mxu0 %v1142
      %1859 = vmatprep.subr.mxu0 %v1147
      %1860 = vmatpush1.msra.mxu0 %v1146
      %1861 = vmatprep.subr.mxu0 %v1151
      %1862 = vmatpush1.msra.mxu0 %v1150
      %1863 = vmatprep.subr.mxu0 %v1155
      %1864 = vmatpush1.msra.mxu0 %v1154
      %1865 = vmatprep.subr.mxu0 %v1159
      %1866 = vmatpush1.msra.mxu0 %v1158
      %1867 = vmatprep.subr.mxu0 %v1163
      %1868 = vmatpush1.msra.mxu0 %v1162
      %1869 = vmatprep.subr.mxu0 %v1167
      %1870 = vmatpush1.msra.mxu0 %v1166
      %1871 = vmatprep.subr.mxu0 %v1171
      %1872 = vmatpush1.msra.mxu0 %v1170
      %1873 = vmatprep.subr.mxu0 %v1175
      %1874 = vmatpush1.msra.mxu0 %v1174
      %1875 = vmatprep.subr.mxu0 %v1179
      %1876 = vmatpush1.msra.mxu0 %v1178
      %1877 = vmatprep.mubr.f32.mxu0 %v919
      %1878 = vmatmul.mubr.f32.gmra.mrb[0].mxu0 %v918
      %v1879 = vpop.f32.mrb[0].mxu0
      %v1880 = vadd.f32 %v1809, %v1879
      %v1881 = vpop.f32.mrb[0].mxu0
      %v1882 = vadd.f32 %v1811, %v1881
      %1883 = vdwg.mxu0
      %1884 = vmatprep.subr.mxu0 %v1183
      %1885 = vmatpush1.msra.mxu0 %v1182
      %1886 = vmatprep.subr.mxu0 %v1187
      %1887 = vmatpush1.msra.mxu0 %v1186
      %1888 = vmatprep.subr.mxu0 %v1191
      %1889 = vmatpush1.msra.mxu0 %v1190
      %1890 = vmatprep.subr.mxu0 %v1195
      %1891 = vmatpush1.msra.mxu0 %v1194
      %1892 = vmatprep.subr.mxu0 %v1199
      %1893 = vmatpush1.msra.mxu0 %v1198
      %1894 = vmatprep.subr.mxu0 %v1203
      %1895 = vmatpush1.msra.mxu0 %v1202
      %1896 = vmatprep.subr.mxu0 %v1207
      %1897 = vmatpush1.msra.mxu0 %v1206
      %1898 = vmatprep.subr.mxu0 %v1211
      %1899 = vmatpush1.msra.mxu0 %v1210
      %1900 = vmatprep.subr.mxu0 %v1215
      %1901 = vmatpush1.msra.mxu0 %v1214
      %1902 = vmatprep.subr.mxu0 %v1219
      %1903 = vmatpush1.msra.mxu0 %v1218
      %1904 = vmatprep.subr.mxu0 %v1223
      %1905 = vmatpush1.msra.mxu0 %v1222
      %1906 = vmatprep.subr.mxu0 %v1227
      %1907 = vmatpush1.msra.mxu0 %v1226
      %1908 = vmatprep.subr.mxu0 %v1231
      %1909 = vmatpush1.msra.mxu0 %v1230
      %1910 = vmatprep.subr.mxu0 %v1235
      %1911 = vmatpush1.msra.mxu0 %v1234
      %1912 = vmatprep.subr.mxu0 %v1239
      %1913 = vmatpush1.msra.mxu0 %v1238
      %1914 = vmatprep.subr.mxu0 %v1243
      %1915 = vmatpush1.msra.mxu0 %v1242
      %1916 = vmatprep.subr.mxu0 %v1247
      %1917 = vmatpush1.msra.mxu0 %v1246
      %1918 = vmatprep.subr.mxu0 %v1251
      %1919 = vmatpush1.msra.mxu0 %v1250
      %1920 = vmatprep.subr.mxu0 %v1255
      %1921 = vmatpush1.msra.mxu0 %v1254
      %1922 = vmatprep.subr.mxu0 %v1259
      %1923 = vmatpush1.msra.mxu0 %v1258
      %1924 = vmatprep.subr.mxu0 %v1263
      %1925 = vmatpush1.msra.mxu0 %v1262
      %1926 = vmatprep.subr.mxu0 %v1267
      %1927 = vmatpush1.msra.mxu0 %v1266
      %1928 = vmatprep.subr.mxu0 %v1271
      %1929 = vmatpush1.msra.mxu0 %v1270
      %1930 = vmatprep.subr.mxu0 %v1275
      %1931 = vmatpush1.msra.mxu0 %v1274
      %1932 = vmatprep.subr.mxu0 %v1279
      %1933 = vmatpush1.msra.mxu0 %v1278
      %1934 = vmatprep.subr.mxu0 %v1283
      %1935 = vmatpush1.msra.mxu0 %v1282
      %1936 = vmatprep.subr.mxu0 %v1287
      %1937 = vmatpush1.msra.mxu0 %v1286
      %1938 = vmatprep.subr.mxu0 %v1291
      %1939 = vmatpush1.msra.mxu0 %v1290
      %1940 = vmatprep.subr.mxu0 %v1295
      %1941 = vmatpush1.msra.mxu0 %v1294
      %1942 = vmatprep.subr.mxu0 %v1299
      %1943 = vmatpush1.msra.mxu0 %v1298
      %1944 = vmatprep.subr.mxu0 %v1303
      %1945 = vmatpush1.msra.mxu0 %v1302
      %1946 = vmatprep.subr.mxu0 %v1307
      %1947 = vmatpush1.msra.mxu0 %v1306
      %1948 = vmatprep.mubr.f32.mxu0 %v921
      %1949 = vmatmul.mubr.f32.gmra.mrb[0].mxu0 %v920
      %v1950 = vpop.f32.mrb[0].mxu0
      %v1951 = vadd.f32 %v1880, %v1950
      %v1952 = vpop.f32.mrb[0].mxu0
      %v1953 = vadd.f32 %v1882, %v1952
      %1954 = vdwg.mxu0
      %1955 = vmatprep.subr.mxu0 %v1311
      %1956 = vmatpush1.msra.mxu0 %v1310
      %1957 = vmatprep.subr.mxu0 %v1315
      %1958 = vmatpush1.msra.mxu0 %v1314
      %1959 = vmatprep.subr.mxu0 %v1319
      %1960 = vmatpush1.msra.mxu0 %v1318
      %1961 = vmatprep.subr.mxu0 %v1323
      %1962 = vmatpush1.msra.mxu0 %v1322
      %1963 = vmatprep.subr.mxu0 %v1327
      %1964 = vmatpush1.msra.mxu0 %v1326
      %1965 = vmatprep.subr.mxu0 %v1331
      %1966 = vmatpush1.msra.mxu0 %v1330
      %1967 = vmatprep.subr.mxu0 %v1335
      %1968 = vmatpush1.msra.mxu0 %v1334
      %1969 = vmatprep.subr.mxu0 %v1339
      %1970 = vmatpush1.msra.mxu0 %v1338
      %1971 = vmatprep.subr.mxu0 %v1343
      %1972 = vmatpush1.msra.mxu0 %v1342
      %1973 = vmatprep.subr.mxu0 %v1347
      %1974 = vmatpush1.msra.mxu0 %v1346
      %1975 = vmatprep.subr.mxu0 %v1351
      %1976 = vmatpush1.msra.mxu0 %v1350
      %1977 = vmatprep.subr.mxu0 %v1355
      %1978 = vmatpush1.msra.mxu0 %v1354
      %1979 = vmatprep.subr.mxu0 %v1359
      %1980 = vmatpush1.msra.mxu0 %v1358
      %1981 = vmatprep.subr.mxu0 %v1363
      %1982 = vmatpush1.msra.mxu0 %v1362
      %1983 = vmatprep.subr.mxu0 %v1367
      %1984 = vmatpush1.msra.mxu0 %v1366
      %1985 = vmatprep.subr.mxu0 %v1371
      %1986 = vmatpush1.msra.mxu0 %v1370
      %1987 = vmatprep.subr.mxu0 %v1375
      %1988 = vmatpush1.msra.mxu0 %v1374
      %1989 = vmatprep.subr.mxu0 %v1379
      %1990 = vmatpush1.msra.mxu0 %v1378
      %1991 = vmatprep.subr.mxu0 %v1383
      %1992 = vmatpush1.msra.mxu0 %v1382
      %1993 = vmatprep.subr.mxu0 %v1387
      %1994 = vmatpush1.msra.mxu0 %v1386
      %1995 = vmatprep.subr.mxu0 %v1391
      %1996 = vmatpush1.msra.mxu0 %v1390
      %1997 = vmatprep.subr.mxu0 %v1395
      %1998 = vmatpush1.msra.mxu0 %v1394
      %1999 = vmatprep.subr.mxu0 %v1399
      %2000 = vmatpush1.msra.mxu0 %v1398
      %2001 = vmatprep.subr.mxu0 %v1403
      %2002 = vmatpush1.msra.mxu0 %v1402
      %2003 = vmatprep.subr.mxu0 %v1407
      %2004 = vmatpush1.msra.mxu0 %v1406
      %2005 = vmatprep.subr.mxu0 %v1411
      %2006 = vmatpush1.msra.mxu0 %v1410
      %2007 = vmatprep.subr.mxu0 %v1415
      %2008 = vmatpush1.msra.mxu0 %v1414
      %2009 = vmatprep.subr.mxu0 %v1419
      %2010 = vmatpush1.msra.mxu0 %v1418
      %2011 = vmatprep.subr.mxu0 %v1423
      %2012 = vmatpush1.msra.mxu0 %v1422
      %2013 = vmatprep.subr.mxu0 %v1427
      %2014 = vmatpush1.msra.mxu0 %v1426
      %2015 = vmatprep.subr.mxu0 %v1431
      %2016 = vmatpush1.msra.mxu0 %v1430
      %2017 = vmatprep.subr.mxu0 %v1435
      %2018 = vmatpush1.msra.mxu0 %v1434
      %2019 = vmatprep.mubr.f32.mxu0 %v923
      %2020 = vmatmul.mubr.f32.gmra.mrb[0].mxu0 %v922
      %v2021 = vpop.f32.mrb[0].mxu0
      %v2022 = vadd.f32 %v1951, %v2021
      %v2023 = vpop.f32.mrb[0].mxu0
      %v2024 = vadd.f32 %v1953, %v2023
      %2025 = vdwg.mxu0
      %v2026 = vmax.f32 %v1738, 0.0
      %v2027 = vmax.f32 %v1740, 0.0
      %v2028 = vmax.f32 %v2022, 0.0
      %v2029 = vmax.f32 %v2024, 0.0
      %v2030 = vld [vmem:[#allocation10] sm:$0xff]
      %v2031 = vld [vmem:[#allocation10 + $0x8] sm:$0xff]
      %v2032 = vld [vmem:[#allocation10 + $0x10] sm:$0xff]
      %v2033 = vld [vmem:[#allocation10 + $0x18] sm:$0xff]
      %v2034 = vld [vmem:[#allocation10 + $0x20] sm:$0xff]
      %v2035 = vld [vmem:[#allocation10 + $0x28] sm:$0xff]
      %v2036 = vld [vmem:[#allocation10 + $0x30] sm:$0xff]
      %v2037 = vld [vmem:[#allocation10 + $0x38] sm:$0xff]
      %v2038 = vld [vmem:[#allocation10 + $0x40] sm:$0xff]
      %v2039 = vld [vmem:[#allocation10 + $0x48] sm:$0xff]
      %v2040 = vld [vmem:[#allocation10 + $0x50] sm:$0xff]
      %v2041 = vld [vmem:[#allocation10 + $0x58] sm:$0xff]
      %v2042 = vld [vmem:[#allocation10 + $0x60] sm:$0xff]
      %v2043 = vld [vmem:[#allocation10 + $0x68] sm:$0xff]
      %v2044 = vld [vmem:[#allocation10 + $0x70] sm:$0xff]
      %v2045 = vld [vmem:[#allocation10 + $0x78] sm:$0xff]
      %v2046 = vld [vmem:[#allocation10 + $0x80] sm:$0xff]
      %v2047 = vld [vmem:[#allocation10 + $0x88] sm:$0xff]
      %v2048 = vld [vmem:[#allocation10 + $0x90] sm:$0xff]
      %v2049 = vld [vmem:[#allocation10 + $0x98] sm:$0xff]
      %v2050 = vld [vmem:[#allocation10 + $0xa0] sm:$0xff]
      %v2051 = vld [vmem:[#allocation10 + $0xa8] sm:$0xff]
      %v2052 = vld [vmem:[#allocation10 + $0xb0] sm:$0xff]
      %v2053 = vld [vmem:[#allocation10 + $0xb8] sm:$0xff]
      %v2054 = vld [vmem:[#allocation10 + $0xc0] sm:$0xff]
      %v2055 = vld [vmem:[#allocation10 + $0xc8] sm:$0xff]
      %v2056 = vld [vmem:[#allocation10 + $0xd0] sm:$0xff]
      %v2057 = vld [vmem:[#allocation10 + $0xd8] sm:$0xff]
      %v2058 = vld [vmem:[#allocation10 + $0xe0] sm:$0xff]
      %v2059 = vld [vmem:[#allocation10 + $0xe8] sm:$0xff]
      %v2060 = vld [vmem:[#allocation10 + $0xf0] sm:$0xff]
      %v2061 = vld [vmem:[#allocation10 + $0xf8] sm:$0xff]
      %v2062 = vld [vmem:[#allocation10 + $0x100] sm:$0xff]
      %v2063 = vld [vmem:[#allocation10 + $0x108] sm:$0xff]
      %v2064 = vld [vmem:[#allocation10 + $0x110] sm:$0xff]
      %v2065 = vld [vmem:[#allocation10 + $0x118] sm:$0xff]
      %v2066 = vld [vmem:[#allocation10 + $0x120] sm:$0xff]
      %v2067 = vld [vmem:[#allocation10 + $0x128] sm:$0xff]
      %v2068 = vld [vmem:[#allocation10 + $0x130] sm:$0xff]
      %v2069 = vld [vmem:[#allocation10 + $0x138] sm:$0xff]
      %v2070 = vld [vmem:[#allocation10 + $0x140] sm:$0xff]
      %v2071 = vld [vmem:[#allocation10 + $0x148] sm:$0xff]
      %v2072 = vld [vmem:[#allocation10 + $0x150] sm:$0xff]
      %v2073 = vld [vmem:[#allocation10 + $0x158] sm:$0xff]
      %v2074 = vld [vmem:[#allocation10 + $0x160] sm:$0xff]
      %v2075 = vld [vmem:[#allocation10 + $0x168] sm:$0xff]
      %v2076 = vld [vmem:[#allocation10 + $0x170] sm:$0xff]
      %v2077 = vld [vmem:[#allocation10 + $0x178] sm:$0xff]
      %v2078 = vld [vmem:[#allocation10 + $0x180] sm:$0xff]
      %v2079 = vld [vmem:[#allocation10 + $0x188] sm:$0xff]
      %v2080 = vld [vmem:[#allocation10 + $0x190] sm:$0xff]
      %v2081 = vld [vmem:[#allocation10 + $0x198] sm:$0xff]
      %v2082 = vld [vmem:[#allocation10 + $0x1a0] sm:$0xff]
      %v2083 = vld [vmem:[#allocation10 + $0x1a8] sm:$0xff]
      %v2084 = vld [vmem:[#allocation10 + $0x1b0] sm:$0xff]
      %v2085 = vld [vmem:[#allocation10 + $0x1b8] sm:$0xff]
      %v2086 = vld [vmem:[#allocation10 + $0x1c0] sm:$0xff]
      %v2087 = vld [vmem:[#allocation10 + $0x1c8] sm:$0xff]
      %v2088 = vld [vmem:[#allocation10 + $0x1d0] sm:$0xff]
      %v2089 = vld [vmem:[#allocation10 + $0x1d8] sm:$0xff]
      %v2090 = vld [vmem:[#allocation10 + $0x1e0] sm:$0xff]
      %v2091 = vld [vmem:[#allocation10 + $0x1e8] sm:$0xff]
      %v2092 = vld [vmem:[#allocation10 + $0x1f0] sm:$0xff]
      %v2093 = vld [vmem:[#allocation10 + $0x1f8] sm:$0xff]
      %v2094 = vld [vmem:[#allocation10 + $0x200] sm:$0xff]
      %v2095 = vld [vmem:[#allocation10 + $0x208] sm:$0xff]
      %v2096 = vld [vmem:[#allocation10 + $0x210] sm:$0xff]
      %v2097 = vld [vmem:[#allocation10 + $0x218] sm:$0xff]
      %v2098 = vld [vmem:[#allocation10 + $0x220] sm:$0xff]
      %v2099 = vld [vmem:[#allocation10 + $0x228] sm:$0xff]
      %v2100 = vld [vmem:[#allocation10 + $0x230] sm:$0xff]
      %v2101 = vld [vmem:[#allocation10 + $0x238] sm:$0xff]
      %v2102 = vld [vmem:[#allocation10 + $0x240] sm:$0xff]
      %v2103 = vld [vmem:[#allocation10 + $0x248] sm:$0xff]
      %v2104 = vld [vmem:[#allocation10 + $0x250] sm:$0xff]
      %v2105 = vld [vmem:[#allocation10 + $0x258] sm:$0xff]
      %v2106 = vld [vmem:[#allocation10 + $0x260] sm:$0xff]
      %v2107 = vld [vmem:[#allocation10 + $0x268] sm:$0xff]
      %v2108 = vld [vmem:[#allocation10 + $0x270] sm:$0xff]
      %v2109 = vld [vmem:[#allocation10 + $0x278] sm:$0xff]
      %v2110 = vld [vmem:[#allocation10 + $0x280] sm:$0xff]
      %v2111 = vld [vmem:[#allocation10 + $0x288] sm:$0xff]
      %v2112 = vld [vmem:[#allocation10 + $0x290] sm:$0xff]
      %v2113 = vld [vmem:[#allocation10 + $0x298] sm:$0xff]
      %v2114 = vld [vmem:[#allocation10 + $0x2a0] sm:$0xff]
      %v2115 = vld [vmem:[#allocation10 + $0x2a8] sm:$0xff]
      %v2116 = vld [vmem:[#allocation10 + $0x2b0] sm:$0xff]
      %v2117 = vld [vmem:[#allocation10 + $0x2b8] sm:$0xff]
      %v2118 = vld [vmem:[#allocation10 + $0x2c0] sm:$0xff]
      %v2119 = vld [vmem:[#allocation10 + $0x2c8] sm:$0xff]
      %v2120 = vld [vmem:[#allocation10 + $0x2d0] sm:$0xff]
      %v2121 = vld [vmem:[#allocation10 + $0x2d8] sm:$0xff]
      %v2122 = vld [vmem:[#allocation10 + $0x2e0] sm:$0xff]
      %v2123 = vld [vmem:[#allocation10 + $0x2e8] sm:$0xff]
      %v2124 = vld [vmem:[#allocation10 + $0x2f0] sm:$0xff]
      %v2125 = vld [vmem:[#allocation10 + $0x2f8] sm:$0xff]
      %v2126 = vld [vmem:[#allocation10 + $0x300] sm:$0xff]
      %v2127 = vld [vmem:[#allocation10 + $0x308] sm:$0xff]
      %v2128 = vld [vmem:[#allocation10 + $0x310] sm:$0xff]
      %v2129 = vld [vmem:[#allocation10 + $0x318] sm:$0xff]
      %v2130 = vld [vmem:[#allocation10 + $0x320] sm:$0xff]
      %v2131 = vld [vmem:[#allocation10 + $0x328] sm:$0xff]
      %v2132 = vld [vmem:[#allocation10 + $0x330] sm:$0xff]
      %v2133 = vld [vmem:[#allocation10 + $0x338] sm:$0xff]
      %v2134 = vld [vmem:[#allocation10 + $0x340] sm:$0xff]
      %v2135 = vld [vmem:[#allocation10 + $0x348] sm:$0xff]
      %v2136 = vld [vmem:[#allocation10 + $0x350] sm:$0xff]
      %v2137 = vld [vmem:[#allocation10 + $0x358] sm:$0xff]
      %v2138 = vld [vmem:[#allocation10 + $0x360] sm:$0xff]
      %v2139 = vld [vmem:[#allocation10 + $0x368] sm:$0xff]
      %v2140 = vld [vmem:[#allocation10 + $0x370] sm:$0xff]
      %v2141 = vld [vmem:[#allocation10 + $0x378] sm:$0xff]
      %v2142 = vld [vmem:[#allocation10 + $0x380] sm:$0xff]
      %v2143 = vld [vmem:[#allocation10 + $0x388] sm:$0xff]
      %v2144 = vld [vmem:[#allocation10 + $0x390] sm:$0xff]
      %v2145 = vld [vmem:[#allocation10 + $0x398] sm:$0xff]
      %v2146 = vld [vmem:[#allocation10 + $0x3a0] sm:$0xff]
      %v2147 = vld [vmem:[#allocation10 + $0x3a8] sm:$0xff]
      %v2148 = vld [vmem:[#allocation10 + $0x3b0] sm:$0xff]
      %v2149 = vld [vmem:[#allocation10 + $0x3b8] sm:$0xff]
      %v2150 = vld [vmem:[#allocation10 + $0x3c0] sm:$0xff]
      %v2151 = vld [vmem:[#allocation10 + $0x3c8] sm:$0xff]
      %v2152 = vld [vmem:[#allocation10 + $0x3d0] sm:$0xff]
      %v2153 = vld [vmem:[#allocation10 + $0x3d8] sm:$0xff]
      %v2154 = vld [vmem:[#allocation10 + $0x3e0] sm:$0xff]
      %v2155 = vld [vmem:[#allocation10 + $0x3e8] sm:$0xff]
      %v2156 = vld [vmem:[#allocation10 + $0x3f0] sm:$0xff]
      %v2157 = vld [vmem:[#allocation10 + $0x3f8] sm:$0xff]
      %v2158 = vld [vmem:[#allocation10 + $0x400] sm:$0xff]
      %v2159 = vld [vmem:[#allocation10 + $0x408] sm:$0xff]
      %v2160 = vld [vmem:[#allocation10 + $0x410] sm:$0xff]
      %v2161 = vld [vmem:[#allocation10 + $0x418] sm:$0xff]
      %v2162 = vld [vmem:[#allocation10 + $0x420] sm:$0xff]
      %v2163 = vld [vmem:[#allocation10 + $0x428] sm:$0xff]
      %v2164 = vld [vmem:[#allocation10 + $0x430] sm:$0xff]
      %v2165 = vld [vmem:[#allocation10 + $0x438] sm:$0xff]
      %v2166 = vld [vmem:[#allocation10 + $0x440] sm:$0xff]
      %v2167 = vld [vmem:[#allocation10 + $0x448] sm:$0xff]
      %v2168 = vld [vmem:[#allocation10 + $0x450] sm:$0xff]
      %v2169 = vld [vmem:[#allocation10 + $0x458] sm:$0xff]
      %v2170 = vld [vmem:[#allocation10 + $0x460] sm:$0xff]
      %v2171 = vld [vmem:[#allocation10 + $0x468] sm:$0xff]
      %v2172 = vld [vmem:[#allocation10 + $0x470] sm:$0xff]
      %v2173 = vld [vmem:[#allocation10 + $0x478] sm:$0xff]
      %v2174 = vld [vmem:[#allocation10 + $0x480] sm:$0xff]
      %v2175 = vld [vmem:[#allocation10 + $0x488] sm:$0xff]
      %v2176 = vld [vmem:[#allocation10 + $0x490] sm:$0xff]
      %v2177 = vld [vmem:[#allocation10 + $0x498] sm:$0xff]
      %v2178 = vld [vmem:[#allocation10 + $0x4a0] sm:$0xff]
      %v2179 = vld [vmem:[#allocation10 + $0x4a8] sm:$0xff]
      %v2180 = vld [vmem:[#allocation10 + $0x4b0] sm:$0xff]
      %v2181 = vld [vmem:[#allocation10 + $0x4b8] sm:$0xff]
      %v2182 = vld [vmem:[#allocation10 + $0x4c0] sm:$0xff]
      %v2183 = vld [vmem:[#allocation10 + $0x4c8] sm:$0xff]
      %v2184 = vld [vmem:[#allocation10 + $0x4d0] sm:$0xff]
      %v2185 = vld [vmem:[#allocation10 + $0x4d8] sm:$0xff]
      %v2186 = vld [vmem:[#allocation10 + $0x4e0] sm:$0xff]
      %v2187 = vld [vmem:[#allocation10 + $0x4e8] sm:$0xff]
      %v2188 = vld [vmem:[#allocation10 + $0x4f0] sm:$0xff]
      %v2189 = vld [vmem:[#allocation10 + $0x4f8] sm:$0xff]
      %v2190 = vld [vmem:[#allocation10 + $0x500] sm:$0xff]
      %v2191 = vld [vmem:[#allocation10 + $0x508] sm:$0xff]
      %v2192 = vld [vmem:[#allocation10 + $0x510] sm:$0xff]
      %v2193 = vld [vmem:[#allocation10 + $0x518] sm:$0xff]
      %v2194 = vld [vmem:[#allocation10 + $0x520] sm:$0xff]
      %v2195 = vld [vmem:[#allocation10 + $0x528] sm:$0xff]
      %v2196 = vld [vmem:[#allocation10 + $0x530] sm:$0xff]
      %v2197 = vld [vmem:[#allocation10 + $0x538] sm:$0xff]
      %v2198 = vld [vmem:[#allocation10 + $0x540] sm:$0xff]
      %v2199 = vld [vmem:[#allocation10 + $0x548] sm:$0xff]
      %v2200 = vld [vmem:[#allocation10 + $0x550] sm:$0xff]
      %v2201 = vld [vmem:[#allocation10 + $0x558] sm:$0xff]
      %v2202 = vld [vmem:[#allocation10 + $0x560] sm:$0xff]
      %v2203 = vld [vmem:[#allocation10 + $0x568] sm:$0xff]
      %v2204 = vld [vmem:[#allocation10 + $0x570] sm:$0xff]
      %v2205 = vld [vmem:[#allocation10 + $0x578] sm:$0xff]
      %v2206 = vld [vmem:[#allocation10 + $0x580] sm:$0xff]
      %v2207 = vld [vmem:[#allocation10 + $0x588] sm:$0xff]
      %v2208 = vld [vmem:[#allocation10 + $0x590] sm:$0xff]
      %v2209 = vld [vmem:[#allocation10 + $0x598] sm:$0xff]
      %v2210 = vld [vmem:[#allocation10 + $0x5a0] sm:$0xff]
      %v2211 = vld [vmem:[#allocation10 + $0x5a8] sm:$0xff]
      %v2212 = vld [vmem:[#allocation10 + $0x5b0] sm:$0xff]
      %v2213 = vld [vmem:[#allocation10 + $0x5b8] sm:$0xff]
      %v2214 = vld [vmem:[#allocation10 + $0x5c0] sm:$0xff]
      %v2215 = vld [vmem:[#allocation10 + $0x5c8] sm:$0xff]
      %v2216 = vld [vmem:[#allocation10 + $0x5d0] sm:$0xff]
      %v2217 = vld [vmem:[#allocation10 + $0x5d8] sm:$0xff]
      %v2218 = vld [vmem:[#allocation10 + $0x5e0] sm:$0xff]
      %v2219 = vld [vmem:[#allocation10 + $0x5e8] sm:$0xff]
      %v2220 = vld [vmem:[#allocation10 + $0x5f0] sm:$0xff]
      %v2221 = vld [vmem:[#allocation10 + $0x5f8] sm:$0xff]
      %v2222 = vld [vmem:[#allocation12] sm:$0x7]
      %v2224 = vlaneseq
      %v2225 = vshrl.u32 %v2224, 7
      %v2226 = vsub.s32 0, %v2225
      %v2227 = vrot.slane %v2222, %v2226
      %v2228 = vlaneseq
      %v2229 = vshrl.u32 %v2228, 7
      %v2230 = vsub.s32 1, %v2229
      %v2231 = vrot.slane %v2222, %v2230
      %v2232 = vlaneseq
      %v2233 = vshrl.u32 %v2232, 7
      %v2234 = vsub.s32 2, %v2233
      %v2235 = vrot.slane %v2222, %v2234
      %2239 = vmatprep.subr.mxu0 %v2031
      %2240 = vmatpush1.msra.mxu0 %v2030
      %2241 = vmatprep.subr.mxu0 %v2034
      %2242 = vmatpush1.msra.mxu0 %v2033
      %2243 = vmatprep.subr.mxu0 %v2037
      %2244 = vmatpush1.msra.mxu0 %v2036
      %2245 = vmatprep.subr.mxu0 %v2040
      %2246 = vmatpush1.msra.mxu0 %v2039
      %2247 = vmatprep.subr.mxu0 %v2043
      %2248 = vmatpush1.msra.mxu0 %v2042
      %2249 = vmatprep.subr.mxu0 %v2046
      %2250 = vmatpush1.msra.mxu0 %v2045
      %2251 = vmatprep.subr.mxu0 %v2049
      %2252 = vmatpush1.msra.mxu0 %v2048
      %2253 = vmatprep.subr.mxu0 %v2052
      %2254 = vmatpush1.msra.mxu0 %v2051
      %2255 = vmatprep.subr.mxu0 %v2055
      %2256 = vmatpush1.msra.mxu0 %v2054
      %2257 = vmatprep.subr.mxu0 %v2058
      %2258 = vmatpush1.msra.mxu0 %v2057
      %2259 = vmatprep.subr.mxu0 %v2061
      %2260 = vmatpush1.msra.mxu0 %v2060
      %2261 = vmatprep.subr.mxu0 %v2064
      %2262 = vmatpush1.msra.mxu0 %v2063
      %2263 = vmatprep.subr.mxu0 %v2067
      %2264 = vmatpush1.msra.mxu0 %v2066
      %2265 = vmatprep.subr.mxu0 %v2070
      %2266 = vmatpush1.msra.mxu0 %v2069
      %2267 = vmatprep.subr.mxu0 %v2073
      %2268 = vmatpush1.msra.mxu0 %v2072
      %2269 = vmatprep.subr.mxu0 %v2076
      %2270 = vmatpush1.msra.mxu0 %v2075
      %2271 = vmatprep.subr.mxu0 %v2079
      %2272 = vmatpush1.msra.mxu0 %v2078
      %2273 = vmatprep.subr.mxu0 %v2082
      %2274 = vmatpush1.msra.mxu0 %v2081
      %2275 = vmatprep.subr.mxu0 %v2085
      %2276 = vmatpush1.msra.mxu0 %v2084
      %2277 = vmatprep.subr.mxu0 %v2088
      %2278 = vmatpush1.msra.mxu0 %v2087
      %2279 = vmatprep.subr.mxu0 %v2091
      %2280 = vmatpush1.msra.mxu0 %v2090
      %2281 = vmatprep.subr.mxu0 %v2094
      %2282 = vmatpush1.msra.mxu0 %v2093
      %2283 = vmatprep.subr.mxu0 %v2097
      %2284 = vmatpush1.msra.mxu0 %v2096
      %2285 = vmatprep.subr.mxu0 %v2100
      %2286 = vmatpush1.msra.mxu0 %v2099
      %2287 = vmatprep.subr.mxu0 %v2103
      %2288 = vmatpush1.msra.mxu0 %v2102
      %2289 = vmatprep.subr.mxu0 %v2106
      %2290 = vmatpush1.msra.mxu0 %v2105
      %2291 = vmatprep.subr.mxu0 %v2109
      %2292 = vmatpush1.msra.mxu0 %v2108
      %2293 = vmatprep.subr.mxu0 %v2112
      %2294 = vmatpush1.msra.mxu0 %v2111
      %2295 = vmatprep.subr.mxu0 %v2115
      %2296 = vmatpush1.msra.mxu0 %v2114
      %2297 = vmatprep.subr.mxu0 %v2118
      %2298 = vmatpush1.msra.mxu0 %v2117
      %2299 = vmatprep.subr.mxu0 %v2121
      %2300 = vmatpush1.msra.mxu0 %v2120
      %2301 = vmatprep.subr.mxu0 %v2124
      %2302 = vmatpush1.msra.mxu0 %v2123
      %2303 = vmatprep.mubr.f32.mxu0 %v2027
      %2304 = vmatmul.mubr.f32.gmra.mrb[0].mxu0 %v2026
      %v2305 = vpop.f32.mrb[0].mxu0
      %v2306 = vadd.f32 %v2227, %v2305
      %v2307 = vpop.f32.mrb[0].mxu0
      %v2308 = vadd.f32 %v2231, %v2307
      %2309 = vdwg.mxu0
      %2310 = vmatprep.subr.mxu0 %v2127
      %2311 = vmatpush1.msra.mxu0 %v2126
      %2312 = vmatprep.subr.mxu0 %v2130
      %2313 = vmatpush1.msra.mxu0 %v2129
      %2314 = vmatprep.subr.mxu0 %v2133
      %2315 = vmatpush1.msra.mxu0 %v2132
      %2316 = vmatprep.subr.mxu0 %v2136
      %2317 = vmatpush1.msra.mxu0 %v2135
      %2318 = vmatprep.subr.mxu0 %v2139
      %2319 = vmatpush1.msra.mxu0 %v2138
      %2320 = vmatprep.subr.mxu0 %v2142
      %2321 = vmatpush1.msra.mxu0 %v2141
      %2322 = vmatprep.subr.mxu0 %v2145
      %2323 = vmatpush1.msra.mxu0 %v2144
      %2324 = vmatprep.subr.mxu0 %v2148
      %2325 = vmatpush1.msra.mxu0 %v2147
      %2326 = vmatprep.subr.mxu0 %v2151
      %2327 = vmatpush1.msra.mxu0 %v2150
      %2328 = vmatprep.subr.mxu0 %v2154
      %2329 = vmatpush1.msra.mxu0 %v2153
      %2330 = vmatprep.subr.mxu0 %v2157
      %2331 = vmatpush1.msra.mxu0 %v2156
      %2332 = vmatprep.subr.mxu0 %v2160
      %2333 = vmatpush1.msra.mxu0 %v2159
      %2334 = vmatprep.subr.mxu0 %v2163
      %2335 = vmatpush1.msra.mxu0 %v2162
      %2336 = vmatprep.subr.mxu0 %v2166
      %2337 = vmatpush1.msra.mxu0 %v2165
      %2338 = vmatprep.subr.mxu0 %v2169
      %2339 = vmatpush1.msra.mxu0 %v2168
      %2340 = vmatprep.subr.mxu0 %v2172
      %2341 = vmatpush1.msra.mxu0 %v2171
      %2342 = vmatprep.subr.mxu0 %v2175
      %2343 = vmatpush1.msra.mxu0 %v2174
      %2344 = vmatprep.subr.mxu0 %v2178
      %2345 = vmatpush1.msra.mxu0 %v2177
      %2346 = vmatprep.subr.mxu0 %v2181
      %2347 = vmatpush1.msra.mxu0 %v2180
      %2348 = vmatprep.subr.mxu0 %v2184
      %2349 = vmatpush1.msra.mxu0 %v2183
      %2350 = vmatprep.subr.mxu0 %v2187
      %2351 = vmatpush1.msra.mxu0 %v2186
      %2352 = vmatprep.subr.mxu0 %v2190
      %2353 = vmatpush1.msra.mxu0 %v2189
      %2354 = vmatprep.subr.mxu0 %v2193
      %2355 = vmatpush1.msra.mxu0 %v2192
      %2356 = vmatprep.subr.mxu0 %v2196
      %2357 = vmatpush1.msra.mxu0 %v2195
      %2358 = vmatprep.subr.mxu0 %v2199
      %2359 = vmatpush1.msra.mxu0 %v2198
      %2360 = vmatprep.subr.mxu0 %v2202
      %2361 = vmatpush1.msra.mxu0 %v2201
      %2362 = vmatprep.subr.mxu0 %v2205
      %2363 = vmatpush1.msra.mxu0 %v2204
      %2364 = vmatprep.subr.mxu0 %v2208
      %2365 = vmatpush1.msra.mxu0 %v2207
      %2366 = vmatprep.subr.mxu0 %v2211
      %2367 = vmatpush1.msra.mxu0 %v2210
      %2368 = vmatprep.subr.mxu0 %v2214
      %2369 = vmatpush1.msra.mxu0 %v2213
      %2370 = vmatprep.subr.mxu0 %v2217
      %2371 = vmatpush1.msra.mxu0 %v2216
      %2372 = vmatprep.subr.mxu0 %v2220
      %2373 = vmatpush1.msra.mxu0 %v2219
      %2374 = vmatprep.mubr.f32.mxu0 %v2029
      %2375 = vmatmul.mubr.f32.gmra.mrb[0].mxu0 %v2028
      %v2376 = vpop.f32.mrb[0].mxu0
      %v2377 = vadd.f32 %v2306, %v2376
      %v2378 = vpop.f32.mrb[0].mxu0
      %v2379 = vadd.f32 %v2308, %v2378
      %2380 = vdwg.mxu0
      %2381 = vmatprep.subr.mxu0 0.0
      %2382 = vmatpush1.msra.mxu0 %v2032
      %2383 = vmatprep.subr.mxu0 0.0
      %2384 = vmatpush1.msra.mxu0 %v2035
      %2385 = vmatprep.subr.mxu0 0.0
      %2386 = vmatpush1.msra.mxu0 %v2038
      %2387 = vmatprep.subr.mxu0 0.0
      %2388 = vmatpush1.msra.mxu0 %v2041
      %2389 = vmatprep.subr.mxu0 0.0
      %2390 = vmatpush1.msra.mxu0 %v2044
      %2391 = vmatprep.subr.mxu0 0.0
      %2392 = vmatpush1.msra.mxu0 %v2047
      %2393 = vmatprep.subr.mxu0 0.0
      %2394 = vmatpush1.msra.mxu0 %v2050
      %2395 = vmatprep.subr.mxu0 0.0
      %2396 = vmatpush1.msra.mxu0 %v2053
      %2397 = vmatprep.subr.mxu0 0.0
      %2398 = vmatpush1.msra.mxu0 %v2056
      %2399 = vmatprep.subr.mxu0 0.0
      %2400 = vmatpush1.msra.mxu0 %v2059
      %2401 = vmatprep.subr.mxu0 0.0
      %2402 = vmatpush1.msra.mxu0 %v2062
      %2403 = vmatprep.subr.mxu0 0.0
      %2404 = vmatpush1.msra.mxu0 %v2065
      %2405 = vmatprep.subr.mxu0 0.0
      %2406 = vmatpush1.msra.mxu0 %v2068
      %2407 = vmatprep.subr.mxu0 0.0
      %2408 = vmatpush1.msra.mxu0 %v2071
      %2409 = vmatprep.subr.mxu0 0.0
      %2410 = vmatpush1.msra.mxu0 %v2074
      %2411 = vmatprep.subr.mxu0 0.0
      %2412 = vmatpush1.msra.mxu0 %v2077
      %2413 = vmatprep.subr.mxu0 0.0
      %2414 = vmatpush1.msra.mxu0 %v2080
      %2415 = vmatprep.subr.mxu0 0.0
      %2416 = vmatpush1.msra.mxu0 %v2083
      %2417 = vmatprep.subr.mxu0 0.0
      %2418 = vmatpush1.msra.mxu0 %v2086
      %2419 = vmatprep.subr.mxu0 0.0
      %2420 = vmatpush1.msra.mxu0 %v2089
      %2421 = vmatprep.subr.mxu0 0.0
      %2422 = vmatpush1.msra.mxu0 %v2092
      %2423 = vmatprep.subr.mxu0 0.0
      %2424 = vmatpush1.msra.mxu0 %v2095
      %2425 = vmatprep.subr.mxu0 0.0
      %2426 = vmatpush1.msra.mxu0 %v2098
      %2427 = vmatprep.subr.mxu0 0.0
      %2428 = vmatpush1.msra.mxu0 %v2101
      %2429 = vmatprep.subr.mxu0 0.0
      %2430 = vmatpush1.msra.mxu0 %v2104
      %2431 = vmatprep.subr.mxu0 0.0
      %2432 = vmatpush1.msra.mxu0 %v2107
      %2433 = vmatprep.subr.mxu0 0.0
      %2434 = vmatpush1.msra.mxu0 %v2110
      %2435 = vmatprep.subr.mxu0 0.0
      %2436 = vmatpush1.msra.mxu0 %v2113
      %2437 = vmatprep.subr.mxu0 0.0
      %2438 = vmatpush1.msra.mxu0 %v2116
      %2439 = vmatprep.subr.mxu0 0.0
      %2440 = vmatpush1.msra.mxu0 %v2119
      %2441 = vmatprep.subr.mxu0 0.0
      %2442 = vmatpush1.msra.mxu0 %v2122
      %2443 = vmatprep.subr.mxu0 0.0
      %2444 = vmatpush1.msra.mxu0 %v2125
      %2445 = vmatprep.mubr.f32.mxu0 %v2027
      %2446 = vmatmul.mubr.f32.gmra.mrb[0].mxu0 %v2026
      %v2447 = vpop.f32.mrb[0].mxu0
      %v2448 = vadd.f32 %v2235, %v2447
      %v2449 = vpop.f32.mrb[0].mxu0
      %2450 = vdwg.mxu0
      %2451 = vmatprep.subr.mxu0 0.0
      %2452 = vmatpush1.msra.mxu0 %v2128
      %2453 = vmatprep.subr.mxu0 0.0
      %2454 = vmatpush1.msra.mxu0 %v2131
      %2455 = vmatprep.subr.mxu0 0.0
      %2456 = vmatpush1.msra.mxu0 %v2134
      %2457 = vmatprep.subr.mxu0 0.0
      %2458 = vmatpush1.msra.mxu0 %v2137
      %2459 = vmatprep.subr.mxu0 0.0
      %2460 = vmatpush1.msra.mxu0 %v2140
      %2461 = vmatprep.subr.mxu0 0.0
      %2462 = vmatpush1.msra.mxu0 %v2143
      %2463 = vmatprep.subr.mxu0 0.0
      %2464 = vmatpush1.msra.mxu0 %v2146
      %2465 = vmatprep.subr.mxu0 0.0
      %2466 = vmatpush1.msra.mxu0 %v2149
      %2467 = vmatprep.subr.mxu0 0.0
      %2468 = vmatpush1.msra.mxu0 %v2152
      %2469 = vmatprep.subr.mxu0 0.0
      %2470 = vmatpush1.msra.mxu0 %v2155
      %2471 = vmatprep.subr.mxu0 0.0
      %2472 = vmatpush1.msra.mxu0 %v2158
      %2473 = vmatprep.subr.mxu0 0.0
      %2474 = vmatpush1.msra.mxu0 %v2161
      %2475 = vmatprep.subr.mxu0 0.0
      %2476 = vmatpush1.msra.mxu0 %v2164
      %2477 = vmatprep.subr.mxu0 0.0
      %2478 = vmatpush1.msra.mxu0 %v2167
      %2479 = vmatprep.subr.mxu0 0.0
      %2480 = vmatpush1.msra.mxu0 %v2170
      %2481 = vmatprep.subr.mxu0 0.0
      %2482 = vmatpush1.msra.mxu0 %v2173
      %2483 = vmatprep.subr.mxu0 0.0
      %2484 = vmatpush1.msra.mxu0 %v2176
      %2485 = vmatprep.subr.mxu0 0.0
      %2486 = vmatpush1.msra.mxu0 %v2179
      %2487 = vmatprep.subr.mxu0 0.0
      %2488 = vmatpush1.msra.mxu0 %v2182
      %2489 = vmatprep.subr.mxu0 0.0
      %2490 = vmatpush1.msra.mxu0 %v2185
      %2491 = vmatprep.subr.mxu0 0.0
      %2492 = vmatpush1.msra.mxu0 %v2188
      %2493 = vmatprep.subr.mxu0 0.0
      %2494 = vmatpush1.msra.mxu0 %v2191
      %2495 = vmatprep.subr.mxu0 0.0
      %2496 = vmatpush1.msra.mxu0 %v2194
      %2497 = vmatprep.subr.mxu0 0.0
      %2498 = vmatpush1.msra.mxu0 %v2197
      %2499 = vmatprep.subr.mxu0 0.0
      %2500 = vmatpush1.msra.mxu0 %v2200
      %2501 = vmatprep.subr.mxu0 0.0
      %2502 = vmatpush1.msra.mxu0 %v2203
      %2503 = vmatprep.subr.mxu0 0.0
      %2504 = vmatpush1.msra.mxu0 %v2206
      %2505 = vmatprep.subr.mxu0 0.0
      %2506 = vmatpush1.msra.mxu0 %v2209
      %2507 = vmatprep.subr.mxu0 0.0
      %2508 = vmatpush1.msra.mxu0 %v2212
      %2509 = vmatprep.subr.mxu0 0.0
      %2510 = vmatpush1.msra.mxu0 %v2215
      %2511 = vmatprep.subr.mxu0 0.0
      %2512 = vmatpush1.msra.mxu0 %v2218
      %2513 = vmatprep.subr.mxu0 0.0
      %2514 = vmatpush1.msra.mxu0 %v2221
      %2515 = vmatprep.mubr.f32.mxu0 %v2029
      %2516 = vmatmul.mubr.f32.gmra.mrb[0].mxu0 %v2028
      %v2517 = vpop.f32.mrb[0].mxu0
      %v2518 = vadd.f32 %v2448, %v2517
      %v2519 = vpop.f32.mrb[0].mxu0
      %2520 = vdwg.mxu0
      %2521 = vst [vmem:[#allocation13] sm:$0xff] %v2377
      %2522 = vst [vmem:[#allocation13 + $0x8] sm:$0xff] %v2379
      %2523 = vst [vmem:[#allocation13 + $0x10] sm:$0xff] %v2518
    $region53: #{tpu_custom_call.1} parent=1 // pred_fallthru
      _
    // Predicated region
    $region54: #{tpu_custom_call.1} parent=1 // pred_check
      _
    $region55: #{tpu_custom_call.1} parent=1 // pred_check_branch
      %2525 = sbr.rel (0) target = $region57
    $region56: #{tpu_custom_call.1} parent=1 // pred_region
      %s2527 = ssub.s32 384, 384
      %2528 = vsyncadd [#allocation6], %s2527
      %s2530 = sshll.u32 [#allocation13], 4
      %s2531 = int_to_ptr.vmem [resolvable:$true] %s2530
      %2533 = dma.vmem_to_hbm [thread:$0]  %s2531, 384, %s6, [#allocation6]
    $region57: #{tpu_custom_call.1} parent=1 // pred_fallthru
      _
    // Predicated region
    $region58: #{tpu_custom_call.1} parent=1 // pred_check
      _
    $region59: #{tpu_custom_call.1} parent=1 // pred_check_branch
      %2535 = sbr.rel (0) target = $region61
    $region60: #{tpu_custom_call.1} parent=1 // pred_region
      %2536 = dma.done [#allocation6], 384
    $region61: #{tpu_custom_call.1} parent=1 // pred_fallthru
      _
    %2537 = vsyncpa [#allocation5], 1
    %2538 = vsyncpa [#allocation8], 1
    %2539 = vsyncpa [#allocation11], 1
    %2540 = vsyncpa [#allocation6], 1

</llo_original>
